<compile_context>
chip_gen: v5e
topology: v5e:2x2
jax: 0.10.0
libtpu: 0.0.40
codegen_flags: <defaults>
</compile_context>

<pallas_src>
import jax
import jax.numpy as jnp
from jax.experimental import pallas as pl
from jax.experimental.pallas import tpu as pltpu

EMBED_SIZE = 768        # matches the module spec
FF_HIDDEN_SIZE = 1024   # matches the module spec
BATCH = 2
SEQ = 8


def ffn_kernel(x_ref, w1_ref, b1_ref, w2_ref, b2_ref, o_ref):
    """One grid step: row tile i, hidden tile j.

    x_ref  : (TM, E)  f32 input rows
    w1_ref : (TH, E)  bf16 fc1 weight slice, PyTorch (out, in) layout
    b1_ref : (1, TH)  f32 fc1 bias slice
    w2_ref : (E, TH)  bf16 fc2 weight slice, PyTorch (out, in) layout
    b2_ref : (1, E)   f32 fc2 bias
    o_ref  : (TM, E)  f32 output rows; VMEM-resident accumulator across j
    """
    j = pl.program_id(1)

    # fc1 slice: contract x's E with W1's last axis (== x @ W1_slice^T) on the MXU,
    # bf16 operands, f32 accumulation; then bias + ReLU as one vectorized VPU op.
    x_bf16 = x_ref[...].astype(jnp.bfloat16)
    h = jax.lax.dot_general(
        x_bf16, w1_ref[...],
        dimension_numbers=(((1,), (1,)), ((), ())),
        preferred_element_type=jnp.float32)
    h = jnp.maximum(h + b1_ref[...], 0.0)

    # Partial fc2: contract this hidden tile with W2's last axis (== h @ W2_slice^T).
    partial = jax.lax.dot_general(
        h.astype(jnp.bfloat16), w2_ref[...],
        dimension_numbers=(((1,), (1,)), ((), ())),
        preferred_element_type=jnp.float32)

    @pl.when(j == 0)
    def _():
        o_ref[...] = partial

    @pl.when(j > 0)
    def _():
        o_ref[...] += partial

    @pl.when(j == pl.num_programs(1) - 1)
    def _():
        o_ref[...] += b2_ref[...]


def feed_forward(x, w1, b1, w2, b2, *, tile_m=128, tile_h=512):
    """x: (B, S, E); w1: (H, E), b1: (H,), w2: (E, H), b2: (E,)  [PyTorch nn.Linear layout].

    Weights should be pre-cast to bf16 once at init; this hot path does no
    transposes / casts — arrays are handed to pallas_call as-is.
    """
    B, S, E = x.shape
    H, E1 = w1.shape
    assert E1 == E and w2.shape == (E, H)
    M = B * S

    x2 = x.reshape(M, E)
    b1_2 = b1.reshape(1, H)
    b2_2 = b2.reshape(1, E)

    tm = min(tile_m, M)
    th = min(tile_h, H)
    assert M % tm == 0 and H % th == 0, "shapes must tile cleanly"
    assert E % 128 == 0 and th % 128 == 0, "lane dims must be multiples of 128"

    flops = 4 * M * E * H            # two matmuls, 2*M*E*H FLOPs each
    bytes_accessed = (
        x2.size * x2.dtype.itemsize
        + w1.size * w1.dtype.itemsize
        + w2.size * w2.dtype.itemsize
        + b1.size * b1.dtype.itemsize
        + b2.size * b2.dtype.itemsize
        + M * E * 4                  # f32 output
    )

    grid_spec = pltpu.PrefetchScalarGridSpec(
        num_scalar_prefetch=0,
        grid=(M // tm, H // th),
        in_specs=[
            pl.BlockSpec((tm, E), lambda i, j: (i, 0)),   # x rows
            pl.BlockSpec((th, E), lambda i, j: (j, 0)),   # W1 slice, (out, in) layout
            pl.BlockSpec((1, th), lambda i, j: (0, j)),   # b1 slice
            pl.BlockSpec((E, th), lambda i, j: (0, j)),   # W2 slice, (out, in) layout
            pl.BlockSpec((1, E),  lambda i, j: (0, 0)),   # b2
        ],
        out_specs=pl.BlockSpec((tm, E), lambda i, j: (i, 0)),
    )

    out2 = pl.pallas_call(
        ffn_kernel,
        out_shape=jax.ShapeDtypeStruct((M, E), jnp.float32),
        grid_spec=grid_spec,
        compiler_params=pltpu.CompilerParams(
            # row tiles independent -> parallel (v7x dual-TC); hidden reduction last, arbitrary
            dimension_semantics=("parallel", "arbitrary"),
        ),
        cost_estimate=pl.CostEstimate(
            flops=flops, transcendentals=0, bytes_accessed=bytes_accessed),
    )(x2, w1, b1_2, w2, b2_2)

    return out2.reshape(B, S, E)


def reference(x, w1, b1, w2, b2):
    h = jnp.maximum(jnp.einsum("bse,he->bsh", x, w1) + b1, 0.0)
    return jnp.einsum("bsh,eh->bse", h, w2) + b2


if __name__ == "__main__":
    key = jax.random.PRNGKey(0)
    kx, kw1, kb1, kw2, kb2 = jax.random.split(key, 5)

    inv_sqrt_e = 1.0 / (EMBED_SIZE ** 0.5)
    inv_sqrt_h = 1.0 / (FF_HIDDEN_SIZE ** 0.5)

    x = jax.random.normal(kx, (BATCH, SEQ, EMBED_SIZE), dtype=jnp.float32)
    # PyTorch nn.Linear layout: weight (out_features, in_features), bias (out_features,),
    # init ~ U(-1/sqrt(in), 1/sqrt(in)).  Weights cast to bf16 ONCE here (init time),
    # not inside the per-call hot path.
    w1 = jax.random.uniform(kw1, (FF_HIDDEN_SIZE, EMBED_SIZE), jnp.float32,
                            -inv_sqrt_e, inv_sqrt_e).astype(jnp.bfloat16)
    b1 = jax.random.uniform(kb1, (FF_HIDDEN_SIZE,), jnp.float32, -inv_sqrt_e, inv_sqrt_e)
    w2 = jax.random.uniform(kw2, (EMBED_SIZE, FF_HIDDEN_SIZE), jnp.float32,
                            -inv_sqrt_h, inv_sqrt_h).astype(jnp.bfloat16)
    b2 = jax.random.uniform(kb2, (EMBED_SIZE,), jnp.float32, -inv_sqrt_h, inv_sqrt_h)

    out = feed_forward(x, w1, b1, w2, b2)
    out = jax.block_until_ready(out)

    # Reference uses the same (bf16-rounded) weights upcast to f32, full f32 math.
    expected = reference(x, w1.astype(jnp.float32), b1, w2.astype(jnp.float32), b2)
    assert out.shape == (BATCH, SEQ, EMBED_SIZE)
    max_err = float(jnp.max(jnp.abs(out - expected)))
    assert jnp.allclose(out, expected, atol=2e-2, rtol=2e-2), \
        f"mismatch vs reference, max abs err={max_err}"

    print("KERNEL_OK")
</pallas_src>

<mosaic_0001>
module attributes {stable_mosaic.version = 11 : i64} {
  func.func @ffn_kernel(%arg0: i32, %arg1: i32, %arg2: memref<16x768xf32, #tpu.memory_space<vmem>>, %arg3: memref<512x768xbf16, #tpu.memory_space<vmem>>, %arg4: memref<1x512xf32, #tpu.memory_space<vmem>>, %arg5: memref<768x512xbf16, #tpu.memory_space<vmem>>, %arg6: memref<1x768xf32, #tpu.memory_space<vmem>>, %arg7: memref<16x768xf32, #tpu.memory_space<vmem>>) attributes {dimension_semantics = [#tpu.dimension_semantics<parallel>, #tpu.dimension_semantics<arbitrary>], iteration_bounds = array<i64: 1, 2>, scalar_prefetch = 0 : i64, scratch_operands = 0 : i64, tpu.core_type = #tpu.core_type<tc>, window_params = [{transform_indices = @transform_0, window_bounds = array<i64: 16, 768>}, {transform_indices = @transform_1, window_bounds = array<i64: 512, 768>}, {transform_indices = @transform_2, window_bounds = array<i64: 1, 512>}, {transform_indices = @transform_3, window_bounds = array<i64: 768, 512>}, {pipeline_mode = #tpu.pipeline_mode<synchronous>, transform_indices = @transform_4, window_bounds = array<i64: 1, 768>}, {transform_indices = @transform_5, window_bounds = array<i64: 16, 768>}]} {
    %c0 = arith.constant 0 : index
    %c0_0 = arith.constant 0 : index
    %0 = vector.load %arg2[%c0, %c0_0] : memref<16x768xf32, #tpu.memory_space<vmem>>, vector<16x768xf32>
    %1 = arith.truncf %0 : vector<16x768xf32> to vector<16x768xbf16>
    %c0_1 = arith.constant 0 : index
    %c0_2 = arith.constant 0 : index
    %2 = vector.load %arg3[%c0_1, %c0_2] : memref<512x768xbf16, #tpu.memory_space<vmem>>, vector<512x768xbf16>
    %cst = arith.constant dense<0.000000e+00> : vector<16x512xf32>
    %3 = tpu.matmul %1, %2, %cst {dimension_numbers = #tpu.dot_dimension_numbers<[1], [1], [0], [0], [0, 0, 1, 0], [], []>} : vector<16x768xbf16>, vector<512x768xbf16>, vector<16x512xf32> -> vector<16x512xf32>
    %c0_3 = arith.constant 0 : index
    %c0_4 = arith.constant 0 : index
    %4 = vector.load %arg4[%c0_3, %c0_4] : memref<1x512xf32, #tpu.memory_space<vmem>>, vector<1x512xf32>
    %5 = vector.broadcast %4 : vector<1x512xf32> to vector<16x512xf32>
    %6 = arith.addf %3, %5 : vector<16x512xf32>
    %cst_5 = arith.constant 0.000000e+00 : f32
    %7 = vector.broadcast %cst_5 : f32 to vector<16x512xf32>
    %8 = arith.maximumf %6, %7 : vector<16x512xf32>
    %9 = arith.truncf %8 : vector<16x512xf32> to vector<16x512xbf16>
    %c0_6 = arith.constant 0 : index
    %c0_7 = arith.constant 0 : index
    %10 = vector.load %arg5[%c0_6, %c0_7] : memref<768x512xbf16, #tpu.memory_space<vmem>>, vector<768x512xbf16>
    %cst_8 = arith.constant dense<0.000000e+00> : vector<16x768xf32>
    %11 = tpu.matmul %9, %10, %cst_8 {dimension_numbers = #tpu.dot_dimension_numbers<[1], [1], [0], [0], [0, 0, 1, 0], [], []>} : vector<16x512xbf16>, vector<768x512xbf16>, vector<16x768xf32> -> vector<16x768xf32>
    %c0_i32 = arith.constant 0 : i32
    %12 = arith.cmpi eq, %arg1, %c0_i32 : i32
    %13 = arith.extui %12 : i1 to i32
    %c0_i32_9 = arith.constant 0 : i32
    %14 = arith.cmpi ne, %13, %c0_i32_9 : i32
    scf.if %14 {
      %c0_13 = arith.constant 0 : index
      %c0_14 = arith.constant 0 : index
      %21 = vector.load %arg7[%c0_13, %c0_14] : memref<16x768xf32, #tpu.memory_space<vmem>>, vector<16x768xf32>
      tpu.vector_store %arg7[%c0_13, %c0_14], %11 {strides = array<i32>} : memref<16x768xf32, #tpu.memory_space<vmem>>, vector<16x768xf32>,
    } else {
    }
    %c0_i32_10 = arith.constant 0 : i32
    %15 = arith.cmpi sgt, %arg1, %c0_i32_10 : i32
    %16 = arith.extui %15 : i1 to i32
    %c0_i32_11 = arith.constant 0 : i32
    %17 = arith.cmpi ne, %16, %c0_i32_11 : i32
    scf.if %17 {
      %c0_13 = arith.constant 0 : index
      %c0_14 = arith.constant 0 : index
      %21 = vector.load %arg7[%c0_13, %c0_14] : memref<16x768xf32, #tpu.memory_space<vmem>>, vector<16x768xf32>
      %22 = arith.addf %21, %11 : vector<16x768xf32>
      %c0_15 = arith.constant 0 : index
      %c0_16 = arith.constant 0 : index
      %23 = vector.load %arg7[%c0_15, %c0_16] : memref<16x768xf32, #tpu.memory_space<vmem>>, vector<16x768xf32>
      tpu.vector_store %arg7[%c0_15, %c0_16], %22 {strides = array<i32>} : memref<16x768xf32, #tpu.memory_space<vmem>>, vector<16x768xf32>,
    } else {
    }
    %c1_i32 = arith.constant 1 : i32
    %18 = arith.cmpi eq, %arg1, %c1_i32 : i32
    %19 = arith.extui %18 : i1 to i32
    %c0_i32_12 = arith.constant 0 : i32
    %20 = arith.cmpi ne, %19, %c0_i32_12 : i32
    scf.if %20 {
      %c0_13 = arith.constant 0 : index
      %c0_14 = arith.constant 0 : index
      %21 = vector.load %arg7[%c0_13, %c0_14] : memref<16x768xf32, #tpu.memory_space<vmem>>, vector<16x768xf32>
      %c0_15 = arith.constant 0 : index
      %c0_16 = arith.constant 0 : index
      %22 = vector.load %arg6[%c0_15, %c0_16] : memref<1x768xf32, #tpu.memory_space<vmem>>, vector<1x768xf32>
      %23 = vector.broadcast %22 : vector<1x768xf32> to vector<16x768xf32>
      %24 = arith.addf %21, %23 : vector<16x768xf32>
      %c0_17 = arith.constant 0 : index
      %c0_18 = arith.constant 0 : index
      %25 = vector.load %arg7[%c0_17, %c0_18] : memref<16x768xf32, #tpu.memory_space<vmem>>, vector<16x768xf32>
      tpu.vector_store %arg7[%c0_17, %c0_18], %24 {strides = array<i32>} : memref<16x768xf32, #tpu.memory_space<vmem>>, vector<16x768xf32>,
    } else {
    }
    return
  }
  func.func @transform_0(%arg0: i32, %arg1: i32) -> (i32, i32) {
    %c0_i32 = arith.constant 0 : i32
    %c0_i32_0 = arith.constant 0 : i32
    return %arg0, %c0_i32 : i32, i32
  }
  func.func @transform_1(%arg0: i32, %arg1: i32) -> (i32, i32) {
    %c0_i32 = arith.constant 0 : i32
    %c0_i32_0 = arith.constant 0 : i32
    return %arg1, %c0_i32 : i32, i32
  }
  func.func @transform_2(%arg0: i32, %arg1: i32) -> (i32, i32) {
    %c0_i32 = arith.constant 0 : i32
    %c0_i32_0 = arith.constant 0 : i32
    return %c0_i32, %arg1 : i32, i32
  }
  func.func @transform_3(%arg0: i32, %arg1: i32) -> (i32, i32) {
    %c0_i32 = arith.constant 0 : i32
    %c0_i32_0 = arith.constant 0 : i32
    return %c0_i32, %arg1 : i32, i32
  }
  func.func @transform_4(%arg0: i32, %arg1: i32) -> (i32, i32) {
    %c0_i32 = arith.constant 0 : i32
    %c0_i32_0 = arith.constant 0 : i32
    %c0_i32_1 = arith.constant 0 : i32
    return %c0_i32, %c0_i32_0 : i32, i32
  }
  func.func @transform_5(%arg0: i32, %arg1: i32) -> (i32, i32) {
    %c0_i32 = arith.constant 0 : i32
    %c0_i32_0 = arith.constant 0 : i32
    return %arg0, %c0_i32 : i32, i32
  }
}

</mosaic_0001>

<llo_original>
// kernel: tpu_custom_call.1
$region0: #{tpu_custom_call.1}
  #allocation0 [shape = 'u32[]', space=smem, size = 0x4, offset = 0x4, fixed_abs, tag = 'smem constant byte address 0x4 - core index']
  #allocation1 [shape = 'u32[72,128]{1,0:T(1,128)}', space=vmem, size = 0x9000, scoped, tag = 'internal scratch']
  %s0 = inlined_call_operand.hbm [shape: f32[16,768], index: 0, kind: input, shape index: {}]
  %s1 = inlined_call_operand.hbm [shape: bf16[1024,768], index: 1, kind: input, shape index: {}]
  %s2 = inlined_call_operand.hbm [shape: f32[1,1024], index: 2, kind: input, shape index: {}]
  %s3 = inlined_call_operand.hbm [shape: bf16[768,1024], index: 3, kind: input, shape index: {}]
  %s4 = inlined_call_operand.hbm [shape: f32[1,768], index: 4, kind: input, shape index: {}]
  %s5 = inlined_call_operand.hbm [shape: f32[16,768], index: 5, kind: output, shape index: {}]
  %s6 = sld [smem:[#allocation0]]
  $region85: #{tpu_custom_call.1} parent=0
    _
  %s8 = ssub.s32 1, %s6
  %s9 = scalar_select 0, %s8, %s6
  $region1: #{tpu_custom_call.1} parent=0
    #allocation2 [shape = 'u8[49152]{0}', space=vmem, size = 0xc000, scoped, tag = 'input window, operand 0, single buffered']
    #allocation3 [shape = 's32[2]{0}', space=sflag, size = 0x8, scoped, tag = 'scoped memory for tpu_custom_call.1']
    #allocation4 [shape = 's32[2]{0}', space=sflag, size = 0x8, scoped, tag = 'scoped memory for tpu_custom_call.1']
    #allocation5 [shape = 'u8[1572864]{0}', space=vmem, size = 0x180000, scoped, tag = 'input window, operand 1']
    #allocation6 [shape = 's32[2]{0}', space=sflag, size = 0x8, scoped, tag = 'scoped memory for tpu_custom_call.1']
    #allocation7 [shape = 'u8[4096]{0}', space=vmem, size = 0x1000, scoped, tag = 'input window, operand 2']
    #allocation8 [shape = 'u8[1572864]{0}', space=vmem, size = 0x180000, scoped, tag = 'input window, operand 3']
    #allocation9 [shape = 's32[2]{0}', space=sflag, size = 0x8, scoped, tag = 'scoped memory for tpu_custom_call.1']
    #allocation10 [shape = 'u8[3072]{0}', space=vmem, size = 0xc00, scoped, tag = 'input window, operand 4, single buffered']
    #allocation11 [shape = 'u8[49152]{0}', space=vmem, size = 0xc000, scoped, tag = 'output window, operand 0, single buffered']
    %10 = vsyncpa [#allocation3], 0
    %11 = vsyncpa [#allocation6], 0
    %s12 = scalar_lea.sflag [#allocation6], 1
    %13 = vsyncpa %s12, 0
    %14 = vsyncpa [#allocation9], 0
    %s15 = scalar_lea.sflag [#allocation9], 1
    %16 = vsyncpa %s15, 0
    %17 = vsyncpa [#allocation4], 0
    loop: start=0, step=1, limit=4
    $region2: #{tpu_custom_call.1} parent=1 // loop_pre_header
      _
    $region3: #{tpu_custom_call.1} parent=1 // loop_header
      %s19 = sphi 0, %s23
      %p20 = scmp.ge.s32.totalorder %s19, 4
      %s26 = sphi 0, %s38
      %s27 = sphi 0, %s34
      %s28 = sphi 0, %s26
      %s29 = sphi 0, %s27
      %s30 = sphi 0, %s28
      %s31 = sphi 0, %s29
      %s41 = sphi 0, %s43
      %s44 = sphi 0, %s41
      %s45 = sphi 0, %s44
      %s61 = sphi 0, %s45
      %s67 = sphi 0, %s69
      %s70 = sphi 0, %s67
      %s71 = sphi 0, %s70
      %s87 = sphi 0, %s71
      %s93 = sphi 0, %s95
      %s96 = sphi 0, %s93
      %s97 = sphi 0, %s96
      %s113 = sphi 0, %s97
      %s119 = sphi 0, %s121
      %s122 = sphi 0, %s119
      %s123 = sphi 0, %s122
      %s139 = sphi 0, %s123
      %s143 = sphi 0, %s143
      %s145 = sphi 0, %s143
      %s146 = sphi 0, %s145
      %s160 = sphi 0, %s146
      %s166 = sphi 0, %s168
      %s169 = sphi 0, %s166
      %s170 = sphi 0, %s169
      %s186 = sphi 0, %s170
    $region4: #{tpu_custom_call.1} parent=1 // loop_header_branch
      %22 = sbr.rel (%p20) target = $region8
    $region5: #{tpu_custom_call.1} parent=1 // loop_body
      %s24 = ssub.s32 %s19, 1
      %s25 = ssub.s32 %s19, 2
      %s32 = sadd.s32 1, %s27
      %p33 = scmp.ge.s32.totalorder %s32, 2
      %s34 = scalar_select %p33, 0, %s32
      %s35 = sadd.s32 1, %s26
      %s36 = scalar_select %p33, %s35, %s26
      %p37 = scmp.ge.s32.totalorder %s36, 1
      %s38 = scalar_select %p37, 0, %s36
      %s39 = ssub.s32 %s26, %s38
      %p40 = scmp.eq.s32.totalorder %s39, 0
      %s42 = sadd.s32 %s41, 1
      %s43 = scalar_select %p40, %s41, %s42
      %p46 = pneg %p40
      %p47 = scmp.eq.s32.totalorder %s19, 1
      %p48 = por %p46, %p47
      %p49 = scmp.ne.s32.totalorder %s41, %s44
      %p50 = scmp.eq.s32.totalorder %s19, 0
      %p51 = por %p49, %p50
      %p52 = scmp.ne.s32.totalorder %s41, %s44
      %p53 = scmp.eq.s32.totalorder %s24, 1
      %p54 = por %p52, %p53
      %p55 = scmp.ne.s32.totalorder %s44, %s45
      %p56 = scmp.eq.s32.totalorder %s24, 0
      %p57 = por %p55, %p56
      %p58 = scmp.ne.s32.totalorder %s44, %s45
      %p59 = scmp.eq.s32.totalorder %s25, 1
      %p60 = por %p58, %p59
      %p62 = scmp.ne.s32.totalorder %s45, %s61
      %p63 = scmp.eq.s32.totalorder %s25, 0
      %p64 = por %p62, %p63
      %s65 = ssub.s32 %s27, %s34
      %p66 = scmp.eq.s32.totalorder %s65, 0
      %s68 = sadd.s32 %s67, 1
      %s69 = scalar_select %p66, %s67, %s68
      %p72 = pneg %p66
      %p73 = scmp.eq.s32.totalorder %s19, 1
      %p74 = por %p72, %p73
      %p75 = scmp.ne.s32.totalorder %s67, %s70
      %p76 = scmp.eq.s32.totalorder %s19, 0
      %p77 = por %p75, %p76
      %p78 = scmp.ne.s32.totalorder %s67, %s70
      %p79 = scmp.eq.s32.totalorder %s24, 1
      %p80 = por %p78, %p79
      %p81 = scmp.ne.s32.totalorder %s70, %s71
      %p82 = scmp.eq.s32.totalorder %s24, 0
      %p83 = por %p81, %p82
      %p84 = scmp.ne.s32.totalorder %s70, %s71
      %p85 = scmp.eq.s32.totalorder %s25, 1
      %p86 = por %p84, %p85
      %p88 = scmp.ne.s32.totalorder %s71, %s87
      %p89 = scmp.eq.s32.totalorder %s25, 0
      %p90 = por %p88, %p89
      %s91 = ssub.s32 %s27, %s34
      %p92 = scmp.eq.s32.totalorder %s91, 0
      %s94 = sadd.s32 %s93, 1
      %s95 = scalar_select %p92, %s93, %s94
      %p98 = pneg %p92
      %p99 = scmp.eq.s32.totalorder %s19, 1
      %p100 = por %p98, %p99
      %p101 = scmp.ne.s32.totalorder %s93, %s96
      %p102 = scmp.eq.s32.totalorder %s19, 0
      %p103 = por %p101, %p102
      %p104 = scmp.ne.s32.totalorder %s93, %s96
      %p105 = scmp.eq.s32.totalorder %s24, 1
      %p106 = por %p104, %p105
      %p107 = scmp.ne.s32.totalorder %s96, %s97
      %p108 = scmp.eq.s32.totalorder %s24, 0
      %p109 = por %p107, %p108
      %p110 = scmp.ne.s32.totalorder %s96, %s97
      %p111 = scmp.eq.s32.totalorder %s25, 1
      %p112 = por %p110, %p111
      %p114 = scmp.ne.s32.totalorder %s97, %s113
      %p115 = scmp.eq.s32.totalorder %s25, 0
      %p116 = por %p114, %p115
      %s117 = ssub.s32 %s27, %s34
      %p118 = scmp.eq.s32.totalorder %s117, 0
      %s120 = sadd.s32 %s119, 1
      %s121 = scalar_select %p118, %s119, %s120
      %p124 = pneg %p118
      %p125 = scmp.eq.s32.totalorder %s19, 1
      %p126 = por %p124, %p125
      %p127 = scmp.ne.s32.totalorder %s119, %s122
      %p128 = scmp.eq.s32.totalorder %s19, 0
      %p129 = por %p127, %p128
      %p130 = scmp.ne.s32.totalorder %s119, %s122
      %p131 = scmp.eq.s32.totalorder %s24, 1
      %p132 = por %p130, %p131
      %p133 = scmp.ne.s32.totalorder %s122, %s123
      %p134 = scmp.eq.s32.totalorder %s24, 0
      %p135 = por %p133, %p134
      %p136 = scmp.ne.s32.totalorder %s122, %s123
      %p137 = scmp.eq.s32.totalorder %s25, 1
      %p138 = por %p136, %p137
      %p140 = scmp.ne.s32.totalorder %s123, %s139
      %p141 = scmp.eq.s32.totalorder %s25, 0
      %p142 = por %p140, %p141
      %s144 = sadd.s32 %s143, 1
      %p147 = scmp.eq.s32.totalorder %s19, 1
      %p148 = scmp.ne.s32.totalorder %s143, %s145
      %p149 = scmp.eq.s32.totalorder %s19, 0
      %p150 = por %p148, %p149
      %p151 = scmp.ne.s32.totalorder %s143, %s145
      %p152 = scmp.eq.s32.totalorder %s24, 1
      %p153 = por %p151, %p152
      %p154 = scmp.ne.s32.totalorder %s145, %s146
      %p155 = scmp.eq.s32.totalorder %s24, 0
      %p156 = por %p154, %p155
      %p157 = scmp.ne.s32.totalorder %s145, %s146
      %p158 = scmp.eq.s32.totalorder %s25, 1
      %p159 = por %p157, %p158
      %p161 = scmp.ne.s32.totalorder %s146, %s160
      %p162 = scmp.eq.s32.totalorder %s25, 0
      %p163 = por %p161, %p162
      %s164 = ssub.s32 %s26, %s38
      %p165 = scmp.eq.s32.totalorder %s164, 0
      %s167 = sadd.s32 %s166, 1
      %s168 = scalar_select %p165, %s166, %s167
      %p171 = pneg %p165
      %p172 = scmp.eq.s32.totalorder %s19, 1
      %p173 = por %p171, %p172
      %p174 = scmp.ne.s32.totalorder %s166, %s169
      %p175 = scmp.eq.s32.totalorder %s19, 0
      %p176 = por %p174, %p175
      %p177 = scmp.ne.s32.totalorder %s166, %s169
      %p178 = scmp.eq.s32.totalorder %s24, 1
      %p179 = por %p177, %p178
      %p180 = scmp.ne.s32.totalorder %s169, %s170
      %p181 = scmp.eq.s32.totalorder %s24, 0
      %p182 = por %p180, %p181
      %p183 = scmp.ne.s32.totalorder %s169, %s170
      %p184 = scmp.eq.s32.totalorder %s25, 1
      %p185 = por %p183, %p184
      %p187 = scmp.ne.s32.totalorder %s170, %s186
      %p188 = scmp.eq.s32.totalorder %s25, 0
      %p189 = por %p187, %p188
      %p190 = scmp.le.s32.totalorder 1, %s19
      %p191 = scmp.lt.s32.totalorder %s19, 3
      %p192 = pnand %p190, %p191
      %p193 = pneg %p192
      // Predicated region
      $region9: #{tpu_custom_call.1} parent=5 // pred_check
        _
      $region10: #{tpu_custom_call.1} parent=5 // pred_check_branch
        %195 = sbr.rel (%p192) target = $region12
      $region11: #{tpu_custom_call.1} parent=5 // pred_region
        %s196 = ssub.s32 %s19, 1
        // Predicated region
        $region13: #{tpu_custom_call.1} parent=11 // pred_check
          %p197 = pneg %p57
        $region14: #{tpu_custom_call.1} parent=11 // pred_check_branch
          %199 = sbr.rel (%p197) target = $region16
        $region15: #{tpu_custom_call.1} parent=11 // pred_region
          %s200 = smul.u32 2, %s28
          %202 = vsyncadd [#allocation3], 0
          %s203 = smul.addr %s200, 6
          %s204 = smul.addr %s203, 8
          %s205 = scalar_lea.hbm %s0, %s204
          %s206 = sshll.u32 %s205, 4
          %s207 = int_to_ptr.hbm [resolvable:$true] %s206
          %s208 = sshll.u32 [#allocation2], 4
          %s209 = int_to_ptr.vmem [resolvable:$true] %s208
          %214 = dma.hbm_to_vmem [thread:$0]  %s207, 1536, %s209, [#allocation3], 768, 768, 48
        $region16: #{tpu_custom_call.1} parent=11 // pred_fallthru
          _
        // Predicated region
        $region17: #{tpu_custom_call.1} parent=11 // pred_check
          %p215 = pneg %p156
        $region18: #{tpu_custom_call.1} parent=11 // pred_check_branch
          %217 = sbr.rel (%p215) target = $region20
        $region19: #{tpu_custom_call.1} parent=11 // pred_region
          %219 = vsyncadd [#allocation9], 0
          %s221 = sshll.u32 %s4, 4
          %s222 = int_to_ptr.hbm [resolvable:$true] %s221
          %s223 = sshll.u32 [#allocation10], 4
          %s224 = int_to_ptr.vmem [resolvable:$true] %s223
          %226 = dma.hbm_to_vmem [thread:$0]  %s222, 96, %s224, [#allocation9]
        $region20: #{tpu_custom_call.1} parent=11 // pred_fallthru
          _
      $region12: #{tpu_custom_call.1} parent=5 // pred_fallthru
        _
      %p227 = scmp.lt.s32.totalorder %s19, 2
      // Predicated region
      $region21: #{tpu_custom_call.1} parent=5 // pred_check
        %p228 = pneg %p227
      $region22: #{tpu_custom_call.1} parent=5 // pred_check_branch
        %230 = sbr.rel (%p228) target = $region24
      $region23: #{tpu_custom_call.1} parent=5 // pred_region
        // Predicated region
        $region25: #{tpu_custom_call.1} parent=23 // pred_check
          %p231 = pneg %p77
        $region26: #{tpu_custom_call.1} parent=23 // pred_check_branch
          %233 = sbr.rel (%p231) target = $region28
        $region27: #{tpu_custom_call.1} parent=23 // pred_region
          %s234 = sand.u32 %s19, 1
          %s235 = scalar_lea.sflag [#allocation6], %s234
          %s236 = sand.u32 %s67, 1
          %s237 = smul.addr %s236, 1536
          %s238 = scalar_lea.vmem [#allocation5], %s237
          %s239 = smul.u32 64, %s27
          %241 = vsyncadd %s235, 0
          %s242 = smul.addr %s239, 6
          %s243 = smul.addr %s242, 4
          %s244 = scalar_lea.hbm %s1, %s243
          %s245 = sshll.u32 %s244, 4
          %s246 = int_to_ptr.hbm [resolvable:$true] %s245
          %s247 = sshll.u32 %s238, 4
          %s248 = int_to_ptr.vmem [resolvable:$true] %s247
          %253 = dma.hbm_to_vmem [thread:$0]  %s246, 24576, %s248, %s235, 384, 384, 24
        $region28: #{tpu_custom_call.1} parent=23 // pred_fallthru
          _
        // Predicated region
        $region29: #{tpu_custom_call.1} parent=23 // pred_check
          %p254 = pneg %p103
        $region30: #{tpu_custom_call.1} parent=23 // pred_check_branch
          %256 = sbr.rel (%p254) target = $region32
        $region31: #{tpu_custom_call.1} parent=23 // pred_region
          %s257 = sand.u32 %s19, 1
          %s258 = scalar_lea.sflag [#allocation6], %s257
          %s259 = sand.u32 %s93, 1
          %s260 = smul.addr %s259, 4
          %s261 = scalar_lea.vmem [#allocation7], %s260
          %s262 = smul.u32 4, %s27
          %264 = vsyncadd %s258, 0
          %s265 = scalar_lea.hbm %s2, %s262
          %s267 = sshll.u32 %s265, 4
          %s268 = int_to_ptr.hbm [resolvable:$true] %s267
          %s269 = sshll.u32 %s261, 4
          %s270 = int_to_ptr.vmem [resolvable:$true] %s269
          %272 = dma.hbm_to_vmem [thread:$0]  %s268, 64, %s270, %s258
        $region32: #{tpu_custom_call.1} parent=23 // pred_fallthru
          _
        // Predicated region
        $region33: #{tpu_custom_call.1} parent=23 // pred_check
          %p273 = pneg %p129
        $region34: #{tpu_custom_call.1} parent=23 // pred_check_branch
          %275 = sbr.rel (%p273) target = $region36
        $region35: #{tpu_custom_call.1} parent=23 // pred_region
          %s276 = sand.u32 %s19, 1
          %s277 = scalar_lea.sflag [#allocation9], %s276
          %s278 = sand.u32 %s119, 1
          %s279 = smul.addr %s278, 1536
          %s280 = scalar_lea.vmem [#allocation8], %s279
          %s281 = smul.u32 4, %s27
          %283 = vsyncadd %s277, 0
          %s284 = smul.addr %s281, 4
          %s285 = scalar_lea.hbm %s3, %s284
          %s286 = sshll.u32 %s285, 4
          %s287 = int_to_ptr.hbm [resolvable:$true] %s286
          %s288 = sshll.u32 %s280, 4
          %s289 = int_to_ptr.vmem [resolvable:$true] %s288
          %294 = dma.hbm_to_vmem [thread:$0]  %s287, 24576, %s289, %s277, 512, 256, 16
        $region36: #{tpu_custom_call.1} parent=23 // pred_fallthru
          _
      $region24: #{tpu_custom_call.1} parent=5 // pred_fallthru
        _
      %p295 = scmp.le.s32.totalorder 1, %s19
      %p296 = scmp.lt.s32.totalorder %s19, 3
      %p297 = pnand %p295, %p296
      %p298 = pneg %p297
      // Predicated region
      $region37: #{tpu_custom_call.1} parent=5 // pred_check
        _
      $region38: #{tpu_custom_call.1} parent=5 // pred_check_branch
        %300 = sbr.rel (%p297) target = $region40
      $region39: #{tpu_custom_call.1} parent=5 // pred_region
        %s301 = ssub.s32 %s19, 1
        // Predicated region
        $region41: #{tpu_custom_call.1} parent=39 // pred_check
          %p302 = pneg %p57
        $region42: #{tpu_custom_call.1} parent=39 // pred_check_branch
          %304 = sbr.rel (%p302) target = $region44
        $region43: #{tpu_custom_call.1} parent=39 // pred_region
          %306 = dma.done [#allocation3], 1536
        $region44: #{tpu_custom_call.1} parent=39 // pred_fallthru
          _
        %s307 = sand.u32 %s24, 1
        %s308 = scalar_lea.sflag [#allocation6], %s307
        %s309 = sand.u32 %s70, 1
        %s310 = smul.addr %s309, 1536
        %s311 = scalar_lea.vmem [#allocation5], %s310
        // Predicated region
        $region45: #{tpu_custom_call.1} parent=39 // pred_check
          %p312 = pneg %p83
        $region46: #{tpu_custom_call.1} parent=39 // pred_check_branch
          %314 = sbr.rel (%p312) target = $region48
        $region47: #{tpu_custom_call.1} parent=39 // pred_region
          %316 = dma.done %s308, 24576
        $region48: #{tpu_custom_call.1} parent=39 // pred_fallthru
          _
        %s317 = sand.u32 %s24, 1
        %s318 = scalar_lea.sflag [#allocation6], %s317
        %s319 = sand.u32 %s96, 1
        %s320 = smul.addr %s319, 4
        %s321 = scalar_lea.vmem [#allocation7], %s320
        // Predicated region
        $region49: #{tpu_custom_call.1} parent=39 // pred_check
          %p322 = pneg %p109
        $region50: #{tpu_custom_call.1} parent=39 // pred_check_branch
          %324 = sbr.rel (%p322) target = $region52
        $region51: #{tpu_custom_call.1} parent=39 // pred_region
          %326 = dma.done %s318, 64
        $region52: #{tpu_custom_call.1} parent=39 // pred_fallthru
          _
        %s327 = sand.u32 %s24, 1
        %s328 = scalar_lea.sflag [#allocation9], %s327
        %s329 = sand.u32 %s122, 1
        %s330 = smul.addr %s329, 1536
        %s331 = scalar_lea.vmem [#allocation8], %s330
        // Predicated region
        $region53: #{tpu_custom_call.1} parent=39 // pred_check
          %p332 = pneg %p135
        $region54: #{tpu_custom_call.1} parent=39 // pred_check_branch
          %334 = sbr.rel (%p332) target = $region56
        $region55: #{tpu_custom_call.1} parent=39 // pred_region
          %336 = dma.done %s328, 24576
        $region56: #{tpu_custom_call.1} parent=39 // pred_fallthru
          _
        // Predicated region
        $region57: #{tpu_custom_call.1} parent=39 // pred_check
          %p337 = pneg %p156
        $region58: #{tpu_custom_call.1} parent=39 // pred_check_branch
          %339 = sbr.rel (%p337) target = $region60
        $region59: #{tpu_custom_call.1} parent=39 // pred_region
          %341 = dma.done [#allocation9], 96
        $region60: #{tpu_custom_call.1} parent=39 // pred_fallthru
          _
        %p342 = pneg %p57
        %p343 = pneg %p54
        %s344 = sand.u32 %s24, 1
        %s345 = scalar_lea.sflag [#allocation6], %s344
        %s346 = sand.u32 %s70, 1
        %s347 = smul.addr %s346, 1536
        %s348 = scalar_lea.vmem [#allocation5], %s347
        %p349 = pneg %p83
        %p350 = pneg %p80
        %s351 = sand.u32 %s24, 1
        %s352 = scalar_lea.sflag [#allocation6], %s351
        %s353 = sand.u32 %s96, 1
        %s354 = smul.addr %s353, 4
        %s355 = scalar_lea.vmem [#allocation7], %s354
        %p356 = pneg %p109
        %p357 = pneg %p106
        %s358 = sand.u32 %s24, 1
        %s359 = scalar_lea.sflag [#allocation9], %s358
        %s360 = sand.u32 %s122, 1
        %s361 = smul.addr %s360, 1536
        %s362 = scalar_lea.vmem [#allocation8], %s361
        %p363 = pneg %p135
        %p364 = pneg %p132
        %p365 = pneg %p156
        %p366 = pneg %p153
        %p367 = pneg %p182
        %p368 = pneg %p179
        %s369 = smul.u32 2, %s28
        %s370 = smul.u32 64, %s29
        %s371 = smul.u32 4, %s29
        %s372 = smul.u32 4, %s29
        %s373 = smul.u32 2, %s28
        %v374 = vld [vmem:[#allocation2] sm:$0xff]
        %v375 = vld [vmem:[#allocation2 + $0x8] sm:$0xff]
        %v376 = vld [vmem:[#allocation2 + $0x10] sm:$0xff]
        %v377 = vld [vmem:[#allocation2 + $0x18] sm:$0xff]
        %v378 = vld [vmem:[#allocation2 + $0x20] sm:$0xff]
        %v379 = vld [vmem:[#allocation2 + $0x28] sm:$0xff]
        %v380 = vld [vmem:[#allocation2 + $0x30] sm:$0xff]
        %v381 = vld [vmem:[#allocation2 + $0x38] sm:$0xff]
        %v382 = vld [vmem:[#allocation2 + $0x40] sm:$0xff]
        %v383 = vld [vmem:[#allocation2 + $0x48] sm:$0xff]
        %v384 = vld [vmem:[#allocation2 + $0x50] sm:$0xff]
        %v385 = vld [vmem:[#allocation2 + $0x58] sm:$0xff]
        %v386 = vpack.c.bf16 %v380, %v374
        %v387 = vpack.c.bf16 %v381, %v375
        %v388 = vpack.c.bf16 %v382, %v376
        %v389 = vpack.c.bf16 %v383, %v377
        %v390 = vpack.c.bf16 %v384, %v378
        %v391 = vpack.c.bf16 %v385, %v379
        %v392 = vld [vmem:[%s311] sm:$0xff]
        %v393 = vld [vmem:[%s311 + $0x8] sm:$0xff]
        %v394 = vld [vmem:[%s311 + $0x10] sm:$0xff]
        %v395 = vld [vmem:[%s311 + $0x18] sm:$0xff]
        %v396 = vld [vmem:[%s311 + $0x20] sm:$0xff]
        %v397 = vld [vmem:[%s311 + $0x28] sm:$0xff]
        %v398 = vld [vmem:[%s311 + $0x30] sm:$0xff]
        %v399 = vld [vmem:[%s311 + $0x38] sm:$0xff]
        %v400 = vld [vmem:[%s311 + $0x40] sm:$0xff]
        %v401 = vld [vmem:[%s311 + $0x48] sm:$0xff]
        %v402 = vld [vmem:[%s311 + $0x50] sm:$0xff]
        %v403 = vld [vmem:[%s311 + $0x58] sm:$0xff]
        %v404 = vld [vmem:[%s311 + $0x60] sm:$0xff]
        %v405 = vld [vmem:[%s311 + $0x68] sm:$0xff]
        %v406 = vld [vmem:[%s311 + $0x70] sm:$0xff]
        %v407 = vld [vmem:[%s311 + $0x78] sm:$0xff]
        %v408 = vld [vmem:[%s311 + $0x80] sm:$0xff]
        %v409 = vld [vmem:[%s311 + $0x88] sm:$0xff]
        %v410 = vld [vmem:[%s311 + $0x90] sm:$0xff]
        %v411 = vld [vmem:[%s311 + $0x98] sm:$0xff]
        %v412 = vld [vmem:[%s311 + $0xa0] sm:$0xff]
        %v413 = vld [vmem:[%s311 + $0xa8] sm:$0xff]
        %v414 = vld [vmem:[%s311 + $0xb0] sm:$0xff]
        %v415 = vld [vmem:[%s311 + $0xb8] sm:$0xff]
        %v416 = vld [vmem:[%s311 + $0xc0] sm:$0xff]
        %v417 = vld [vmem:[%s311 + $0xc8] sm:$0xff]
        %v418 = vld [vmem:[%s311 + $0xd0] sm:$0xff]
        %v419 = vld [vmem:[%s311 + $0xd8] sm:$0xff]
        %v420 = vld [vmem:[%s311 + $0xe0] sm:$0xff]
        %v421 = vld [vmem:[%s311 + $0xe8] sm:$0xff]
        %v422 = vld [vmem:[%s311 + $0xf0] sm:$0xff]
        %v423 = vld [vmem:[%s311 + $0xf8] sm:$0xff]
        %v424 = vld [vmem:[%s311 + $0x100] sm:$0xff]
        %v425 = vld [vmem:[%s311 + $0x108] sm:$0xff]
        %v426 = vld [vmem:[%s311 + $0x110] sm:$0xff]
        %v427 = vld [vmem:[%s311 + $0x118] sm:$0xff]
        %v428 = vld [vmem:[%s311 + $0x120] sm:$0xff]
        %v429 = vld [vmem:[%s311 + $0x128] sm:$0xff]
        %v430 = vld [vmem:[%s311 + $0x130] sm:$0xff]
        %v431 = vld [vmem:[%s311 + $0x138] sm:$0xff]
        %v432 = vld [vmem:[%s311 + $0x140] sm:$0xff]
        %v433 = vld [vmem:[%s311 + $0x148] sm:$0xff]
        %v434 = vld [vmem:[%s311 + $0x150] sm:$0xff]
        %v435 = vld [vmem:[%s311 + $0x158] sm:$0xff]
        %v436 = vld [vmem:[%s311 + $0x160] sm:$0xff]
        %v437 = vld [vmem:[%s311 + $0x168] sm:$0xff]
        %v438 = vld [vmem:[%s311 + $0x170] sm:$0xff]
        %v439 = vld [vmem:[%s311 + $0x178] sm:$0xff]
        %v440 = vld [vmem:[%s311 + $0x180] sm:$0xff]
        %v441 = vld [vmem:[%s311 + $0x188] sm:$0xff]
        %v442 = vld [vmem:[%s311 + $0x190] sm:$0xff]
        %v443 = vld [vmem:[%s311 + $0x198] sm:$0xff]
        %v444 = vld [vmem:[%s311 + $0x1a0] sm:$0xff]
        %v445 = vld [vmem:[%s311 + $0x1a8] sm:$0xff]
        %v446 = vld [vmem:[%s311 + $0x1b0] sm:$0xff]
        %v447 = vld [vmem:[%s311 + $0x1b8] sm:$0xff]
        %v448 = vld [vmem:[%s311 + $0x1c0] sm:$0xff]
        %v449 = vld [vmem:[%s311 + $0x1c8] sm:$0xff]
        %v450 = vld [vmem:[%s311 + $0x1d0] sm:$0xff]
        %v451 = vld [vmem:[%s311 + $0x1d8] sm:$0xff]
        %v452 = vld [vmem:[%s311 + $0x1e0] sm:$0xff]
        %v453 = vld [vmem:[%s311 + $0x1e8] sm:$0xff]
        %v454 = vld [vmem:[%s311 + $0x1f0] sm:$0xff]
        %v455 = vld [vmem:[%s311 + $0x1f8] sm:$0xff]
        %v456 = vld [vmem:[%s311 + $0x200] sm:$0xff]
        %v457 = vld [vmem:[%s311 + $0x208] sm:$0xff]
        %v458 = vld [vmem:[%s311 + $0x210] sm:$0xff]
        %v459 = vld [vmem:[%s311 + $0x218] sm:$0xff]
        %v460 = vld [vmem:[%s311 + $0x220] sm:$0xff]
        %v461 = vld [vmem:[%s311 + $0x228] sm:$0xff]
        %v462 = vld [vmem:[%s311 + $0x230] sm:$0xff]
        %v463 = vld [vmem:[%s311 + $0x238] sm:$0xff]
        %v464 = vld [vmem:[%s311 + $0x240] sm:$0xff]
        %v465 = vld [vmem:[%s311 + $0x248] sm:$0xff]
        %v466 = vld [vmem:[%s311 + $0x250] sm:$0xff]
        %v467 = vld [vmem:[%s311 + $0x258] sm:$0xff]
        %v468 = vld [vmem:[%s311 + $0x260] sm:$0xff]
        %v469 = vld [vmem:[%s311 + $0x268] sm:$0xff]
        %v470 = vld [vmem:[%s311 + $0x270] sm:$0xff]
        %v471 = vld [vmem:[%s311 + $0x278] sm:$0xff]
        %v472 = vld [vmem:[%s311 + $0x280] sm:$0xff]
        %v473 = vld [vmem:[%s311 + $0x288] sm:$0xff]
        %v474 = vld [vmem:[%s311 + $0x290] sm:$0xff]
        %v475 = vld [vmem:[%s311 + $0x298] sm:$0xff]
        %v476 = vld [vmem:[%s311 + $0x2a0] sm:$0xff]
        %v477 = vld [vmem:[%s311 + $0x2a8] sm:$0xff]
        %v478 = vld [vmem:[%s311 + $0x2b0] sm:$0xff]
        %v479 = vld [vmem:[%s311 + $0x2b8] sm:$0xff]
        %v480 = vld [vmem:[%s311 + $0x2c0] sm:$0xff]
        %v481 = vld [vmem:[%s311 + $0x2c8] sm:$0xff]
        %v482 = vld [vmem:[%s311 + $0x2d0] sm:$0xff]
        %v483 = vld [vmem:[%s311 + $0x2d8] sm:$0xff]
        %v484 = vld [vmem:[%s311 + $0x2e0] sm:$0xff]
        %v485 = vld [vmem:[%s311 + $0x2e8] sm:$0xff]
        %v486 = vld [vmem:[%s311 + $0x2f0] sm:$0xff]
        %v487 = vld [vmem:[%s311 + $0x2f8] sm:$0xff]
        %v488 = vld [vmem:[%s311 + $0x300] sm:$0xff]
        %v489 = vld [vmem:[%s311 + $0x308] sm:$0xff]
        %v490 = vld [vmem:[%s311 + $0x310] sm:$0xff]
        %v491 = vld [vmem:[%s311 + $0x318] sm:$0xff]
        %v492 = vld [vmem:[%s311 + $0x320] sm:$0xff]
        %v493 = vld [vmem:[%s311 + $0x328] sm:$0xff]
        %v494 = vld [vmem:[%s311 + $0x330] sm:$0xff]
        %v495 = vld [vmem:[%s311 + $0x338] sm:$0xff]
        %v496 = vld [vmem:[%s311 + $0x340] sm:$0xff]
        %v497 = vld [vmem:[%s311 + $0x348] sm:$0xff]
        %v498 = vld [vmem:[%s311 + $0x350] sm:$0xff]
        %v499 = vld [vmem:[%s311 + $0x358] sm:$0xff]
        %v500 = vld [vmem:[%s311 + $0x360] sm:$0xff]
        %v501 = vld [vmem:[%s311 + $0x368] sm:$0xff]
        %v502 = vld [vmem:[%s311 + $0x370] sm:$0xff]
        %v503 = vld [vmem:[%s311 + $0x378] sm:$0xff]
        %v504 = vld [vmem:[%s311 + $0x380] sm:$0xff]
        %v505 = vld [vmem:[%s311 + $0x388] sm:$0xff]
        %v506 = vld [vmem:[%s311 + $0x390] sm:$0xff]
        %v507 = vld [vmem:[%s311 + $0x398] sm:$0xff]
        %v508 = vld [vmem:[%s311 + $0x3a0] sm:$0xff]
        %v509 = vld [vmem:[%s311 + $0x3a8] sm:$0xff]
        %v510 = vld [vmem:[%s311 + $0x3b0] sm:$0xff]
        %v511 = vld [vmem:[%s311 + $0x3b8] sm:$0xff]
        %v512 = vld [vmem:[%s311 + $0x3c0] sm:$0xff]
        %v513 = vld [vmem:[%s311 + $0x3c8] sm:$0xff]
        %v514 = vld [vmem:[%s311 + $0x3d0] sm:$0xff]
        %v515 = vld [vmem:[%s311 + $0x3d8] sm:$0xff]
        %v516 = vld [vmem:[%s311 + $0x3e0] sm:$0xff]
        %v517 = vld [vmem:[%s311 + $0x3e8] sm:$0xff]
        %v518 = vld [vmem:[%s311 + $0x3f0] sm:$0xff]
        %v519 = vld [vmem:[%s311 + $0x3f8] sm:$0xff]
        %v520 = vld [vmem:[%s311 + $0x400] sm:$0xff]
        %v521 = vld [vmem:[%s311 + $0x408] sm:$0xff]
        %v522 = vld [vmem:[%s311 + $0x410] sm:$0xff]
        %v523 = vld [vmem:[%s311 + $0x418] sm:$0xff]
        %v524 = vld [vmem:[%s311 + $0x420] sm:$0xff]
        %v525 = vld [vmem:[%s311 + $0x428] sm:$0xff]
        %v526 = vld [vmem:[%s311 + $0x430] sm:$0xff]
        %v527 = vld [vmem:[%s311 + $0x438] sm:$0xff]
        %v528 = vld [vmem:[%s311 + $0x440] sm:$0xff]
        %v529 = vld [vmem:[%s311 + $0x448] sm:$0xff]
        %v530 = vld [vmem:[%s311 + $0x450] sm:$0xff]
        %v531 = vld [vmem:[%s311 + $0x458] sm:$0xff]
        %v532 = vld [vmem:[%s311 + $0x460] sm:$0xff]
        %v533 = vld [vmem:[%s311 + $0x468] sm:$0xff]
        %v534 = vld [vmem:[%s311 + $0x470] sm:$0xff]
        %v535 = vld [vmem:[%s311 + $0x478] sm:$0xff]
        %v536 = vld [vmem:[%s311 + $0x480] sm:$0xff]
        %v537 = vld [vmem:[%s311 + $0x488] sm:$0xff]
        %v538 = vld [vmem:[%s311 + $0x490] sm:$0xff]
        %v539 = vld [vmem:[%s311 + $0x498] sm:$0xff]
        %v540 = vld [vmem:[%s311 + $0x4a0] sm:$0xff]
        %v541 = vld [vmem:[%s311 + $0x4a8] sm:$0xff]
        %v542 = vld [vmem:[%s311 + $0x4b0] sm:$0xff]
        %v543 = vld [vmem:[%s311 + $0x4b8] sm:$0xff]
        %v544 = vld [vmem:[%s311 + $0x4c0] sm:$0xff]
        %v545 = vld [vmem:[%s311 + $0x4c8] sm:$0xff]
        %v546 = vld [vmem:[%s311 + $0x4d0] sm:$0xff]
        %v547 = vld [vmem:[%s311 + $0x4d8] sm:$0xff]
        %v548 = vld [vmem:[%s311 + $0x4e0] sm:$0xff]
        %v549 = vld [vmem:[%s311 + $0x4e8] sm:$0xff]
        %v550 = vld [vmem:[%s311 + $0x4f0] sm:$0xff]
        %v551 = vld [vmem:[%s311 + $0x4f8] sm:$0xff]
        %v552 = vld [vmem:[%s311 + $0x500] sm:$0xff]
        %v553 = vld [vmem:[%s311 + $0x508] sm:$0xff]
        %v554 = vld [vmem:[%s311 + $0x510] sm:$0xff]
        %v555 = vld [vmem:[%s311 + $0x518] sm:$0xff]
        %v556 = vld [vmem:[%s311 + $0x520] sm:$0xff]
        %v557 = vld [vmem:[%s311 + $0x528] sm:$0xff]
        %v558 = vld [vmem:[%s311 + $0x530] sm:$0xff]
        %v559 = vld [vmem:[%s311 + $0x538] sm:$0xff]
        %v560 = vld [vmem:[%s311 + $0x540] sm:$0xff]
        %v561 = vld [vmem:[%s311 + $0x548] sm:$0xff]
        %v562 = vld [vmem:[%s311 + $0x550] sm:$0xff]
        %v563 = vld [vmem:[%s311 + $0x558] sm:$0xff]
        %v564 = vld [vmem:[%s311 + $0x560] sm:$0xff]
        %v565 = vld [vmem:[%s311 + $0x568] sm:$0xff]
        %v566 = vld [vmem:[%s311 + $0x570] sm:$0xff]
        %v567 = vld [vmem:[%s311 + $0x578] sm:$0xff]
        %v568 = vld [vmem:[%s311 + $0x580] sm:$0xff]
        %v569 = vld [vmem:[%s311 + $0x588] sm:$0xff]
        %v570 = vld [vmem:[%s311 + $0x590] sm:$0xff]
        %v571 = vld [vmem:[%s311 + $0x598] sm:$0xff]
        %v572 = vld [vmem:[%s311 + $0x5a0] sm:$0xff]
        %v573 = vld [vmem:[%s311 + $0x5a8] sm:$0xff]
        %v574 = vld [vmem:[%s311 + $0x5b0] sm:$0xff]
        %v575 = vld [vmem:[%s311 + $0x5b8] sm:$0xff]
        %v576 = vld [vmem:[%s311 + $0x5c0] sm:$0xff]
        %v577 = vld [vmem:[%s311 + $0x5c8] sm:$0xff]
        %v578 = vld [vmem:[%s311 + $0x5d0] sm:$0xff]
        %v579 = vld [vmem:[%s311 + $0x5d8] sm:$0xff]
        %v580 = vld [vmem:[%s311 + $0x5e0] sm:$0xff]
        %v581 = vld [vmem:[%s311 + $0x5e8] sm:$0xff]
        %v582 = vld [vmem:[%s311 + $0x5f0] sm:$0xff]
        %v583 = vld [vmem:[%s311 + $0x5f8] sm:$0xff]
        %v584 = vld [vmem:[%s321] sm:$0xf]
        %v586 = vperm.slane %v584, 0
        %v587 = vperm.slane %v584, 1
        %v588 = vperm.slane %v584, 2
        %v589 = vperm.slane %v584, 3
        %v786 = vunpack.c.l.b16 %v392
        %v787 = vunpack.c.h.b16 %v392
        %v788 = vunpack.c.l.b16 %v393
        %v789 = vunpack.c.h.b16 %v393
        %v790 = vunpack.c.l.b16 %v394
        %v791 = vunpack.c.h.b16 %v394
        %v792 = vunpack.c.l.b16 %v395
        %v793 = vunpack.c.h.b16 %v395
        %v794 = vunpack.c.l.b16 %v396
        %v795 = vunpack.c.h.b16 %v396
        %v796 = vunpack.c.l.b16 %v397
        %v797 = vunpack.c.h.b16 %v397
        %v798 = vunpack.c.l.b16 %v398
        %v799 = vunpack.c.h.b16 %v398
        %v800 = vunpack.c.l.b16 %v399
        %v801 = vunpack.c.h.b16 %v399
        %v802 = vunpack.c.l.b16 %v400
        %v803 = vunpack.c.h.b16 %v400
        %v804 = vunpack.c.l.b16 %v401
        %v805 = vunpack.c.h.b16 %v401
        %v806 = vunpack.c.l.b16 %v402
        %v807 = vunpack.c.h.b16 %v402
        %v808 = vunpack.c.l.b16 %v403
        %v809 = vunpack.c.h.b16 %v403
        %v810 = vunpack.c.l.b16 %v404
        %v811 = vunpack.c.h.b16 %v404
        %v812 = vunpack.c.l.b16 %v405
        %v813 = vunpack.c.h.b16 %v405
        %v814 = vunpack.c.l.b16 %v406
        %v815 = vunpack.c.h.b16 %v406
        %v816 = vunpack.c.l.b16 %v407
        %v817 = vunpack.c.h.b16 %v407
        %v818 = vunpack.c.l.b16 %v408
        %v819 = vunpack.c.h.b16 %v408
        %v820 = vunpack.c.l.b16 %v409
        %v821 = vunpack.c.h.b16 %v409
        %v822 = vunpack.c.l.b16 %v410
        %v823 = vunpack.c.h.b16 %v410
        %v824 = vunpack.c.l.b16 %v411
        %v825 = vunpack.c.h.b16 %v411
        %v826 = vunpack.c.l.b16 %v412
        %v827 = vunpack.c.h.b16 %v412
        %v828 = vunpack.c.l.b16 %v413
        %v829 = vunpack.c.h.b16 %v413
        %v830 = vunpack.c.l.b16 %v414
        %v831 = vunpack.c.h.b16 %v414
        %v832 = vunpack.c.l.b16 %v415
        %v833 = vunpack.c.h.b16 %v415
        %v834 = vunpack.c.l.b16 %v416
        %v835 = vunpack.c.h.b16 %v416
        %v836 = vunpack.c.l.b16 %v417
        %v837 = vunpack.c.h.b16 %v417
        %v838 = vunpack.c.l.b16 %v418
        %v839 = vunpack.c.h.b16 %v418
        %v840 = vunpack.c.l.b16 %v419
        %v841 = vunpack.c.h.b16 %v419
        %v842 = vunpack.c.l.b16 %v420
        %v843 = vunpack.c.h.b16 %v420
        %v844 = vunpack.c.l.b16 %v421
        %v845 = vunpack.c.h.b16 %v421
        %v846 = vunpack.c.l.b16 %v422
        %v847 = vunpack.c.h.b16 %v422
        %v848 = vunpack.c.l.b16 %v423
        %v849 = vunpack.c.h.b16 %v423
        %v850 = vunpack.c.l.b16 %v424
        %v851 = vunpack.c.h.b16 %v424
        %v852 = vunpack.c.l.b16 %v425
        %v853 = vunpack.c.h.b16 %v425
        %v854 = vunpack.c.l.b16 %v426
        %v855 = vunpack.c.h.b16 %v426
        %v856 = vunpack.c.l.b16 %v427
        %v857 = vunpack.c.h.b16 %v427
        %v858 = vunpack.c.l.b16 %v428
        %v859 = vunpack.c.h.b16 %v428
        %v860 = vunpack.c.l.b16 %v429
        %v861 = vunpack.c.h.b16 %v429
        %v862 = vunpack.c.l.b16 %v430
        %v863 = vunpack.c.h.b16 %v430
        %v864 = vunpack.c.l.b16 %v431
        %v865 = vunpack.c.h.b16 %v431
        %v866 = vunpack.c.l.b16 %v432
        %v867 = vunpack.c.h.b16 %v432
        %v868 = vunpack.c.l.b16 %v433
        %v869 = vunpack.c.h.b16 %v433
        %v870 = vunpack.c.l.b16 %v434
        %v871 = vunpack.c.h.b16 %v434
        %v872 = vunpack.c.l.b16 %v435
        %v873 = vunpack.c.h.b16 %v435
        %v874 = vunpack.c.l.b16 %v436
        %v875 = vunpack.c.h.b16 %v436
        %v876 = vunpack.c.l.b16 %v437
        %v877 = vunpack.c.h.b16 %v437
        %v878 = vunpack.c.l.b16 %v438
        %v879 = vunpack.c.h.b16 %v438
        %v880 = vunpack.c.l.b16 %v439
        %v881 = vunpack.c.h.b16 %v439
        %v882 = vunpack.c.l.b16 %v440
        %v883 = vunpack.c.h.b16 %v440
        %v884 = vunpack.c.l.b16 %v441
        %v885 = vunpack.c.h.b16 %v441
        %v886 = vunpack.c.l.b16 %v442
        %v887 = vunpack.c.h.b16 %v442
        %v888 = vunpack.c.l.b16 %v443
        %v889 = vunpack.c.h.b16 %v443
        %v890 = vunpack.c.l.b16 %v444
        %v891 = vunpack.c.h.b16 %v444
        %v892 = vunpack.c.l.b16 %v445
        %v893 = vunpack.c.h.b16 %v445
        %v894 = vunpack.c.l.b16 %v446
        %v895 = vunpack.c.h.b16 %v446
        %v896 = vunpack.c.l.b16 %v447
        %v897 = vunpack.c.h.b16 %v447
        %v898 = vunpack.c.l.b16 %v448
        %v899 = vunpack.c.h.b16 %v448
        %v900 = vunpack.c.l.b16 %v449
        %v901 = vunpack.c.h.b16 %v449
        %v902 = vunpack.c.l.b16 %v450
        %v903 = vunpack.c.h.b16 %v450
        %v904 = vunpack.c.l.b16 %v451
        %v905 = vunpack.c.h.b16 %v451
        %v906 = vunpack.c.l.b16 %v452
        %v907 = vunpack.c.h.b16 %v452
        %v908 = vunpack.c.l.b16 %v453
        %v909 = vunpack.c.h.b16 %v453
        %v910 = vunpack.c.l.b16 %v454
        %v911 = vunpack.c.h.b16 %v454
        %v912 = vunpack.c.l.b16 %v455
        %v913 = vunpack.c.h.b16 %v455
        %v914 = vunpack.c.l.b16 %v456
        %v915 = vunpack.c.h.b16 %v456
        %v916 = vunpack.c.l.b16 %v457
        %v917 = vunpack.c.h.b16 %v457
        %v918 = vunpack.c.l.b16 %v458
        %v919 = vunpack.c.h.b16 %v458
        %v920 = vunpack.c.l.b16 %v459
        %v921 = vunpack.c.h.b16 %v459
        %v922 = vunpack.c.l.b16 %v460
        %v923 = vunpack.c.h.b16 %v460
        %v924 = vunpack.c.l.b16 %v461
        %v925 = vunpack.c.h.b16 %v461
        %v926 = vunpack.c.l.b16 %v462
        %v927 = vunpack.c.h.b16 %v462
        %v928 = vunpack.c.l.b16 %v463
        %v929 = vunpack.c.h.b16 %v463
        %v930 = vunpack.c.l.b16 %v464
        %v931 = vunpack.c.h.b16 %v464
        %v932 = vunpack.c.l.b16 %v465
        %v933 = vunpack.c.h.b16 %v465
        %v934 = vunpack.c.l.b16 %v466
        %v935 = vunpack.c.h.b16 %v466
        %v936 = vunpack.c.l.b16 %v467
        %v937 = vunpack.c.h.b16 %v467
        %v938 = vunpack.c.l.b16 %v468
        %v939 = vunpack.c.h.b16 %v468
        %v940 = vunpack.c.l.b16 %v469
        %v941 = vunpack.c.h.b16 %v469
        %v942 = vunpack.c.l.b16 %v470
        %v943 = vunpack.c.h.b16 %v470
        %v944 = vunpack.c.l.b16 %v471
        %v945 = vunpack.c.h.b16 %v471
        %v946 = vunpack.c.l.b16 %v472
        %v947 = vunpack.c.h.b16 %v472
        %v948 = vunpack.c.l.b16 %v473
        %v949 = vunpack.c.h.b16 %v473
        %v950 = vunpack.c.l.b16 %v474
        %v951 = vunpack.c.h.b16 %v474
        %v952 = vunpack.c.l.b16 %v475
        %v953 = vunpack.c.h.b16 %v475
        %v954 = vunpack.c.l.b16 %v476
        %v955 = vunpack.c.h.b16 %v476
        %v956 = vunpack.c.l.b16 %v477
        %v957 = vunpack.c.h.b16 %v477
        %v958 = vunpack.c.l.b16 %v478
        %v959 = vunpack.c.h.b16 %v478
        %v960 = vunpack.c.l.b16 %v479
        %v961 = vunpack.c.h.b16 %v479
        %v962 = vunpack.c.l.b16 %v480
        %v963 = vunpack.c.h.b16 %v480
        %v964 = vunpack.c.l.b16 %v481
        %v965 = vunpack.c.h.b16 %v481
        %v966 = vunpack.c.l.b16 %v482
        %v967 = vunpack.c.h.b16 %v482
        %v968 = vunpack.c.l.b16 %v483
        %v969 = vunpack.c.h.b16 %v483
        %v970 = vunpack.c.l.b16 %v484
        %v971 = vunpack.c.h.b16 %v484
        %v972 = vunpack.c.l.b16 %v485
        %v973 = vunpack.c.h.b16 %v485
        %v974 = vunpack.c.l.b16 %v486
        %v975 = vunpack.c.h.b16 %v486
        %v976 = vunpack.c.l.b16 %v487
        %v977 = vunpack.c.h.b16 %v487
        %v978 = vunpack.c.l.b16 %v488
        %v979 = vunpack.c.h.b16 %v488
        %v980 = vunpack.c.l.b16 %v489
        %v981 = vunpack.c.h.b16 %v489
        %v982 = vunpack.c.l.b16 %v490
        %v983 = vunpack.c.h.b16 %v490
        %v984 = vunpack.c.l.b16 %v491
        %v985 = vunpack.c.h.b16 %v491
        %v986 = vunpack.c.l.b16 %v492
        %v987 = vunpack.c.h.b16 %v492
        %v988 = vunpack.c.l.b16 %v493
        %v989 = vunpack.c.h.b16 %v493
        %v990 = vunpack.c.l.b16 %v494
        %v991 = vunpack.c.h.b16 %v494
        %v992 = vunpack.c.l.b16 %v495
        %v993 = vunpack.c.h.b16 %v495
        %v994 = vunpack.c.l.b16 %v496
        %v995 = vunpack.c.h.b16 %v496
        %v996 = vunpack.c.l.b16 %v497
        %v997 = vunpack.c.h.b16 %v497
        %v998 = vunpack.c.l.b16 %v498
        %v999 = vunpack.c.h.b16 %v498
        %v1000 = vunpack.c.l.b16 %v499
        %v1001 = vunpack.c.h.b16 %v499
        %v1002 = vunpack.c.l.b16 %v500
        %v1003 = vunpack.c.h.b16 %v500
        %v1004 = vunpack.c.l.b16 %v501
        %v1005 = vunpack.c.h.b16 %v501
        %v1006 = vunpack.c.l.b16 %v502
        %v1007 = vunpack.c.h.b16 %v502
        %v1008 = vunpack.c.l.b16 %v503
        %v1009 = vunpack.c.h.b16 %v503
        %v1010 = vunpack.c.l.b16 %v504
        %v1011 = vunpack.c.h.b16 %v504
        %v1012 = vunpack.c.l.b16 %v505
        %v1013 = vunpack.c.h.b16 %v505
        %v1014 = vunpack.c.l.b16 %v506
        %v1015 = vunpack.c.h.b16 %v506
        %v1016 = vunpack.c.l.b16 %v507
        %v1017 = vunpack.c.h.b16 %v507
        %v1018 = vunpack.c.l.b16 %v508
        %v1019 = vunpack.c.h.b16 %v508
        %v1020 = vunpack.c.l.b16 %v509
        %v1021 = vunpack.c.h.b16 %v509
        %v1022 = vunpack.c.l.b16 %v510
        %v1023 = vunpack.c.h.b16 %v510
        %v1024 = vunpack.c.l.b16 %v511
        %v1025 = vunpack.c.h.b16 %v511
        %v1026 = vunpack.c.l.b16 %v512
        %v1027 = vunpack.c.h.b16 %v512
        %v1028 = vunpack.c.l.b16 %v513
        %v1029 = vunpack.c.h.b16 %v513
        %v1030 = vunpack.c.l.b16 %v514
        %v1031 = vunpack.c.h.b16 %v514
        %v1032 = vunpack.c.l.b16 %v515
        %v1033 = vunpack.c.h.b16 %v515
        %v1034 = vunpack.c.l.b16 %v516
        %v1035 = vunpack.c.h.b16 %v516
        %v1036 = vunpack.c.l.b16 %v517
        %v1037 = vunpack.c.h.b16 %v517
        %v1038 = vunpack.c.l.b16 %v518
        %v1039 = vunpack.c.h.b16 %v518
        %v1040 = vunpack.c.l.b16 %v519
        %v1041 = vunpack.c.h.b16 %v519
        %v1042 = vunpack.c.l.b16 %v520
        %v1043 = vunpack.c.h.b16 %v520
        %v1044 = vunpack.c.l.b16 %v521
        %v1045 = vunpack.c.h.b16 %v521
        %v1046 = vunpack.c.l.b16 %v522
        %v1047 = vunpack.c.h.b16 %v522
        %v1048 = vunpack.c.l.b16 %v523
        %v1049 = vunpack.c.h.b16 %v523
        %v1050 = vunpack.c.l.b16 %v524
        %v1051 = vunpack.c.h.b16 %v524
        %v1052 = vunpack.c.l.b16 %v525
        %v1053 = vunpack.c.h.b16 %v525
        %v1054 = vunpack.c.l.b16 %v526
        %v1055 = vunpack.c.h.b16 %v526
        %v1056 = vunpack.c.l.b16 %v527
        %v1057 = vunpack.c.h.b16 %v527
        %v1058 = vunpack.c.l.b16 %v528
        %v1059 = vunpack.c.h.b16 %v528
        %v1060 = vunpack.c.l.b16 %v529
        %v1061 = vunpack.c.h.b16 %v529
        %v1062 = vunpack.c.l.b16 %v530
        %v1063 = vunpack.c.h.b16 %v530
        %v1064 = vunpack.c.l.b16 %v531
        %v1065 = vunpack.c.h.b16 %v531
        %v1066 = vunpack.c.l.b16 %v532
        %v1067 = vunpack.c.h.b16 %v532
        %v1068 = vunpack.c.l.b16 %v533
        %v1069 = vunpack.c.h.b16 %v533
        %v1070 = vunpack.c.l.b16 %v534
        %v1071 = vunpack.c.h.b16 %v534
        %v1072 = vunpack.c.l.b16 %v535
        %v1073 = vunpack.c.h.b16 %v535
        %v1074 = vunpack.c.l.b16 %v536
        %v1075 = vunpack.c.h.b16 %v536
        %v1076 = vunpack.c.l.b16 %v537
        %v1077 = vunpack.c.h.b16 %v537
        %v1078 = vunpack.c.l.b16 %v538
        %v1079 = vunpack.c.h.b16 %v538
        %v1080 = vunpack.c.l.b16 %v539
        %v1081 = vunpack.c.h.b16 %v539
        %v1082 = vunpack.c.l.b16 %v540
        %v1083 = vunpack.c.h.b16 %v540
        %v1084 = vunpack.c.l.b16 %v541
        %v1085 = vunpack.c.h.b16 %v541
        %v1086 = vunpack.c.l.b16 %v542
        %v1087 = vunpack.c.h.b16 %v542
        %v1088 = vunpack.c.l.b16 %v543
        %v1089 = vunpack.c.h.b16 %v543
        %v1090 = vunpack.c.l.b16 %v544
        %v1091 = vunpack.c.h.b16 %v544
        %v1092 = vunpack.c.l.b16 %v545
        %v1093 = vunpack.c.h.b16 %v545
        %v1094 = vunpack.c.l.b16 %v546
        %v1095 = vunpack.c.h.b16 %v546
        %v1096 = vunpack.c.l.b16 %v547
        %v1097 = vunpack.c.h.b16 %v547
        %v1098 = vunpack.c.l.b16 %v548
        %v1099 = vunpack.c.h.b16 %v548
        %v1100 = vunpack.c.l.b16 %v549
        %v1101 = vunpack.c.h.b16 %v549
        %v1102 = vunpack.c.l.b16 %v550
        %v1103 = vunpack.c.h.b16 %v550
        %v1104 = vunpack.c.l.b16 %v551
        %v1105 = vunpack.c.h.b16 %v551
        %v1106 = vunpack.c.l.b16 %v552
        %v1107 = vunpack.c.h.b16 %v552
        %v1108 = vunpack.c.l.b16 %v553
        %v1109 = vunpack.c.h.b16 %v553
        %v1110 = vunpack.c.l.b16 %v554
        %v1111 = vunpack.c.h.b16 %v554
        %v1112 = vunpack.c.l.b16 %v555
        %v1113 = vunpack.c.h.b16 %v555
        %v1114 = vunpack.c.l.b16 %v556
        %v1115 = vunpack.c.h.b16 %v556
        %v1116 = vunpack.c.l.b16 %v557
        %v1117 = vunpack.c.h.b16 %v557
        %v1118 = vunpack.c.l.b16 %v558
        %v1119 = vunpack.c.h.b16 %v558
        %v1120 = vunpack.c.l.b16 %v559
        %v1121 = vunpack.c.h.b16 %v559
        %v1122 = vunpack.c.l.b16 %v560
        %v1123 = vunpack.c.h.b16 %v560
        %v1124 = vunpack.c.l.b16 %v561
        %v1125 = vunpack.c.h.b16 %v561
        %v1126 = vunpack.c.l.b16 %v562
        %v1127 = vunpack.c.h.b16 %v562
        %v1128 = vunpack.c.l.b16 %v563
        %v1129 = vunpack.c.h.b16 %v563
        %v1130 = vunpack.c.l.b16 %v564
        %v1131 = vunpack.c.h.b16 %v564
        %v1132 = vunpack.c.l.b16 %v565
        %v1133 = vunpack.c.h.b16 %v565
        %v1134 = vunpack.c.l.b16 %v566
        %v1135 = vunpack.c.h.b16 %v566
        %v1136 = vunpack.c.l.b16 %v567
        %v1137 = vunpack.c.h.b16 %v567
        %v1138 = vunpack.c.l.b16 %v568
        %v1139 = vunpack.c.h.b16 %v568
        %v1140 = vunpack.c.l.b16 %v569
        %v1141 = vunpack.c.h.b16 %v569
        %v1142 = vunpack.c.l.b16 %v570
        %v1143 = vunpack.c.h.b16 %v570
        %v1144 = vunpack.c.l.b16 %v571
        %v1145 = vunpack.c.h.b16 %v571
        %v1146 = vunpack.c.l.b16 %v572
        %v1147 = vunpack.c.h.b16 %v572
        %v1148 = vunpack.c.l.b16 %v573
        %v1149 = vunpack.c.h.b16 %v573
        %v1150 = vunpack.c.l.b16 %v574
        %v1151 = vunpack.c.h.b16 %v574
        %v1152 = vunpack.c.l.b16 %v575
        %v1153 = vunpack.c.h.b16 %v575
        %v1154 = vunpack.c.l.b16 %v576
        %v1155 = vunpack.c.h.b16 %v576
        %v1156 = vunpack.c.l.b16 %v577
        %v1157 = vunpack.c.h.b16 %v577
        %v1158 = vunpack.c.l.b16 %v578
        %v1159 = vunpack.c.h.b16 %v578
        %v1160 = vunpack.c.l.b16 %v579
        %v1161 = vunpack.c.h.b16 %v579
        %v1162 = vunpack.c.l.b16 %v580
        %v1163 = vunpack.c.h.b16 %v580
        %v1164 = vunpack.c.l.b16 %v581
        %v1165 = vunpack.c.h.b16 %v581
        %v1166 = vunpack.c.l.b16 %v582
        %v1167 = vunpack.c.h.b16 %v582
        %v1168 = vunpack.c.l.b16 %v583
        %v1169 = vunpack.c.h.b16 %v583
        %v1170 = vpack.c.b16 %v792, %v786
        %v1171 = vpack.c.b16 %v793, %v787
        %v1172 = vpack.c.b16 %v794, %v788
        %v1173 = vpack.c.b16 %v795, %v789
        %v1174 = vpack.c.b16 %v796, %v790
        %v1175 = vpack.c.b16 %v797, %v791
        %v1176 = vpack.c.b16 %v804, %v798
        %v1177 = vpack.c.b16 %v805, %v799
        %v1178 = vpack.c.b16 %v806, %v800
        %v1179 = vpack.c.b16 %v807, %v801
        %v1180 = vpack.c.b16 %v808, %v802
        %v1181 = vpack.c.b16 %v809, %v803
        %v1182 = vpack.c.b16 %v816, %v810
        %v1183 = vpack.c.b16 %v817, %v811
        %v1184 = vpack.c.b16 %v818, %v812
        %v1185 = vpack.c.b16 %v819, %v813
        %v1186 = vpack.c.b16 %v820, %v814
        %v1187 = vpack.c.b16 %v821, %v815
        %v1188 = vpack.c.b16 %v828, %v822
        %v1189 = vpack.c.b16 %v829, %v823
        %v1190 = vpack.c.b16 %v830, %v824
        %v1191 = vpack.c.b16 %v831, %v825
        %v1192 = vpack.c.b16 %v832, %v826
        %v1193 = vpack.c.b16 %v833, %v827
        %v1194 = vpack.c.b16 %v840, %v834
        %v1195 = vpack.c.b16 %v841, %v835
        %v1196 = vpack.c.b16 %v842, %v836
        %v1197 = vpack.c.b16 %v843, %v837
        %v1198 = vpack.c.b16 %v844, %v838
        %v1199 = vpack.c.b16 %v845, %v839
        %v1200 = vpack.c.b16 %v852, %v846
        %v1201 = vpack.c.b16 %v853, %v847
        %v1202 = vpack.c.b16 %v854, %v848
        %v1203 = vpack.c.b16 %v855, %v849
        %v1204 = vpack.c.b16 %v856, %v850
        %v1205 = vpack.c.b16 %v857, %v851
        %v1206 = vpack.c.b16 %v864, %v858
        %v1207 = vpack.c.b16 %v865, %v859
        %v1208 = vpack.c.b16 %v866, %v860
        %v1209 = vpack.c.b16 %v867, %v861
        %v1210 = vpack.c.b16 %v868, %v862
        %v1211 = vpack.c.b16 %v869, %v863
        %v1212 = vpack.c.b16 %v876, %v870
        %v1213 = vpack.c.b16 %v877, %v871
        %v1214 = vpack.c.b16 %v878, %v872
        %v1215 = vpack.c.b16 %v879, %v873
        %v1216 = vpack.c.b16 %v880, %v874
        %v1217 = vpack.c.b16 %v881, %v875
        %v1218 = vpack.c.b16 %v888, %v882
        %v1219 = vpack.c.b16 %v889, %v883
        %v1220 = vpack.c.b16 %v890, %v884
        %v1221 = vpack.c.b16 %v891, %v885
        %v1222 = vpack.c.b16 %v892, %v886
        %v1223 = vpack.c.b16 %v893, %v887
        %v1224 = vpack.c.b16 %v900, %v894
        %v1225 = vpack.c.b16 %v901, %v895
        %v1226 = vpack.c.b16 %v902, %v896
        %v1227 = vpack.c.b16 %v903, %v897
        %v1228 = vpack.c.b16 %v904, %v898
        %v1229 = vpack.c.b16 %v905, %v899
        %v1230 = vpack.c.b16 %v912, %v906
        %v1231 = vpack.c.b16 %v913, %v907
        %v1232 = vpack.c.b16 %v914, %v908
        %v1233 = vpack.c.b16 %v915, %v909
        %v1234 = vpack.c.b16 %v916, %v910
        %v1235 = vpack.c.b16 %v917, %v911
        %v1236 = vpack.c.b16 %v924, %v918
        %v1237 = vpack.c.b16 %v925, %v919
        %v1238 = vpack.c.b16 %v926, %v920
        %v1239 = vpack.c.b16 %v927, %v921
        %v1240 = vpack.c.b16 %v928, %v922
        %v1241 = vpack.c.b16 %v929, %v923
        %v1242 = vpack.c.b16 %v936, %v930
        %v1243 = vpack.c.b16 %v937, %v931
        %v1244 = vpack.c.b16 %v938, %v932
        %v1245 = vpack.c.b16 %v939, %v933
        %v1246 = vpack.c.b16 %v940, %v934
        %v1247 = vpack.c.b16 %v941, %v935
        %v1248 = vpack.c.b16 %v948, %v942
        %v1249 = vpack.c.b16 %v949, %v943
        %v1250 = vpack.c.b16 %v950, %v944
        %v1251 = vpack.c.b16 %v951, %v945
        %v1252 = vpack.c.b16 %v952, %v946
        %v1253 = vpack.c.b16 %v953, %v947
        %v1254 = vpack.c.b16 %v960, %v954
        %v1255 = vpack.c.b16 %v961, %v955
        %v1256 = vpack.c.b16 %v962, %v956
        %v1257 = vpack.c.b16 %v963, %v957
        %v1258 = vpack.c.b16 %v964, %v958
        %v1259 = vpack.c.b16 %v965, %v959
        %v1260 = vpack.c.b16 %v972, %v966
        %v1261 = vpack.c.b16 %v973, %v967
        %v1262 = vpack.c.b16 %v974, %v968
        %v1263 = vpack.c.b16 %v975, %v969
        %v1264 = vpack.c.b16 %v976, %v970
        %v1265 = vpack.c.b16 %v977, %v971
        %v1266 = vpack.c.b16 %v984, %v978
        %v1267 = vpack.c.b16 %v985, %v979
        %v1268 = vpack.c.b16 %v986, %v980
        %v1269 = vpack.c.b16 %v987, %v981
        %v1270 = vpack.c.b16 %v988, %v982
        %v1271 = vpack.c.b16 %v989, %v983
        %v1272 = vpack.c.b16 %v996, %v990
        %v1273 = vpack.c.b16 %v997, %v991
        %v1274 = vpack.c.b16 %v998, %v992
        %v1275 = vpack.c.b16 %v999, %v993
        %v1276 = vpack.c.b16 %v1000, %v994
        %v1277 = vpack.c.b16 %v1001, %v995
        %v1278 = vpack.c.b16 %v1008, %v1002
        %v1279 = vpack.c.b16 %v1009, %v1003
        %v1280 = vpack.c.b16 %v1010, %v1004
        %v1281 = vpack.c.b16 %v1011, %v1005
        %v1282 = vpack.c.b16 %v1012, %v1006
        %v1283 = vpack.c.b16 %v1013, %v1007
        %v1284 = vpack.c.b16 %v1020, %v1014
        %v1285 = vpack.c.b16 %v1021, %v1015
        %v1286 = vpack.c.b16 %v1022, %v1016
        %v1287 = vpack.c.b16 %v1023, %v1017
        %v1288 = vpack.c.b16 %v1024, %v1018
        %v1289 = vpack.c.b16 %v1025, %v1019
        %v1290 = vpack.c.b16 %v1032, %v1026
        %v1291 = vpack.c.b16 %v1033, %v1027
        %v1292 = vpack.c.b16 %v1034, %v1028
        %v1293 = vpack.c.b16 %v1035, %v1029
        %v1294 = vpack.c.b16 %v1036, %v1030
        %v1295 = vpack.c.b16 %v1037, %v1031
        %v1296 = vpack.c.b16 %v1044, %v1038
        %v1297 = vpack.c.b16 %v1045, %v1039
        %v1298 = vpack.c.b16 %v1046, %v1040
        %v1299 = vpack.c.b16 %v1047, %v1041
        %v1300 = vpack.c.b16 %v1048, %v1042
        %v1301 = vpack.c.b16 %v1049, %v1043
        %v1302 = vpack.c.b16 %v1056, %v1050
        %v1303 = vpack.c.b16 %v1057, %v1051
        %v1304 = vpack.c.b16 %v1058, %v1052
        %v1305 = vpack.c.b16 %v1059, %v1053
        %v1306 = vpack.c.b16 %v1060, %v1054
        %v1307 = vpack.c.b16 %v1061, %v1055
        %v1308 = vpack.c.b16 %v1068, %v1062
        %v1309 = vpack.c.b16 %v1069, %v1063
        %v1310 = vpack.c.b16 %v1070, %v1064
        %v1311 = vpack.c.b16 %v1071, %v1065
        %v1312 = vpack.c.b16 %v1072, %v1066
        %v1313 = vpack.c.b16 %v1073, %v1067
        %v1314 = vpack.c.b16 %v1080, %v1074
        %v1315 = vpack.c.b16 %v1081, %v1075
        %v1316 = vpack.c.b16 %v1082, %v1076
        %v1317 = vpack.c.b16 %v1083, %v1077
        %v1318 = vpack.c.b16 %v1084, %v1078
        %v1319 = vpack.c.b16 %v1085, %v1079
        %v1320 = vpack.c.b16 %v1092, %v1086
        %v1321 = vpack.c.b16 %v1093, %v1087
        %v1322 = vpack.c.b16 %v1094, %v1088
        %v1323 = vpack.c.b16 %v1095, %v1089
        %v1324 = vpack.c.b16 %v1096, %v1090
        %v1325 = vpack.c.b16 %v1097, %v1091
        %v1326 = vpack.c.b16 %v1104, %v1098
        %v1327 = vpack.c.b16 %v1105, %v1099
        %v1328 = vpack.c.b16 %v1106, %v1100
        %v1329 = vpack.c.b16 %v1107, %v1101
        %v1330 = vpack.c.b16 %v1108, %v1102
        %v1331 = vpack.c.b16 %v1109, %v1103
        %v1332 = vpack.c.b16 %v1116, %v1110
        %v1333 = vpack.c.b16 %v1117, %v1111
        %v1334 = vpack.c.b16 %v1118, %v1112
        %v1335 = vpack.c.b16 %v1119, %v1113
        %v1336 = vpack.c.b16 %v1120, %v1114
        %v1337 = vpack.c.b16 %v1121, %v1115
        %v1338 = vpack.c.b16 %v1128, %v1122
        %v1339 = vpack.c.b16 %v1129, %v1123
        %v1340 = vpack.c.b16 %v1130, %v1124
        %v1341 = vpack.c.b16 %v1131, %v1125
        %v1342 = vpack.c.b16 %v1132, %v1126
        %v1343 = vpack.c.b16 %v1133, %v1127
        %v1344 = vpack.c.b16 %v1140, %v1134
        %v1345 = vpack.c.b16 %v1141, %v1135
        %v1346 = vpack.c.b16 %v1142, %v1136
        %v1347 = vpack.c.b16 %v1143, %v1137
        %v1348 = vpack.c.b16 %v1144, %v1138
        %v1349 = vpack.c.b16 %v1145, %v1139
        %v1350 = vpack.c.b16 %v1152, %v1146
        %v1351 = vpack.c.b16 %v1153, %v1147
        %v1352 = vpack.c.b16 %v1154, %v1148
        %v1353 = vpack.c.b16 %v1155, %v1149
        %v1354 = vpack.c.b16 %v1156, %v1150
        %v1355 = vpack.c.b16 %v1157, %v1151
        %v1356 = vpack.c.b16 %v1164, %v1158
        %v1357 = vpack.c.b16 %v1165, %v1159
        %v1358 = vpack.c.b16 %v1166, %v1160
        %v1359 = vpack.c.b16 %v1167, %v1161
        %v1360 = vpack.c.b16 %v1168, %v1162
        %v1361 = vpack.c.b16 %v1169, %v1163
        %1554 = vmatpush.bf16.xpose.msra.mxu0 %v1212
        %1555 = vmatpush.bf16.xpose.msra.mxu0 %v1206
        %1556 = vmatpush.bf16.xpose.msra.mxu0 %v1200
        %1557 = vmatpush.bf16.xpose.msra.mxu0 %v1194
        %1558 = vmatpush.bf16.xpose.msra.mxu0 %v1188
        %1559 = vmatpush.bf16.xpose.msra.mxu0 %v1182
        %1560 = vmatpush.bf16.xpose.msra.mxu0 %v1176
        %1561 = vmatpush.bf16.xpose.msra.mxu0 %v1170
        %1562 = vmatmul.bf16.gmra.mxu0 %v386
        %v1563 = vpop.f32.mrf.mxu0
        %v1564 = vadd.f32 %v586, %v1563
        %v1565 = vpop.f32.mrf.mxu0
        %v1566 = vadd.f32 %v586, %v1565
        %1567 = vdwg.mxu0
        %1568 = vmatpush.bf16.xpose.msra.mxu0 %v1213
        %1569 = vmatpush.bf16.xpose.msra.mxu0 %v1207
        %1570 = vmatpush.bf16.xpose.msra.mxu0 %v1201
        %1571 = vmatpush.bf16.xpose.msra.mxu0 %v1195
        %1572 = vmatpush.bf16.xpose.msra.mxu0 %v1189
        %1573 = vmatpush.bf16.xpose.msra.mxu0 %v1183
        %1574 = vmatpush.bf16.xpose.msra.mxu0 %v1177
        %1575 = vmatpush.bf16.xpose.msra.mxu0 %v1171
        %1576 = vmatmul.bf16.gmra.mxu0 %v387
        %v1577 = vpop.f32.mrf.mxu0
        %v1578 = vadd.f32 %v1564, %v1577
        %v1579 = vpop.f32.mrf.mxu0
        %v1580 = vadd.f32 %v1566, %v1579
        %1581 = vdwg.mxu0
        %1582 = vmatpush.bf16.xpose.msra.mxu0 %v1214
        %1583 = vmatpush.bf16.xpose.msra.mxu0 %v1208
        %1584 = vmatpush.bf16.xpose.msra.mxu0 %v1202
        %1585 = vmatpush.bf16.xpose.msra.mxu0 %v1196
        %1586 = vmatpush.bf16.xpose.msra.mxu0 %v1190
        %1587 = vmatpush.bf16.xpose.msra.mxu0 %v1184
        %1588 = vmatpush.bf16.xpose.msra.mxu0 %v1178
        %1589 = vmatpush.bf16.xpose.msra.mxu0 %v1172
        %1590 = vmatmul.bf16.gmra.mxu0 %v388
        %v1591 = vpop.f32.mrf.mxu0
        %v1592 = vadd.f32 %v1578, %v1591
        %v1593 = vpop.f32.mrf.mxu0
        %v1594 = vadd.f32 %v1580, %v1593
        %1595 = vdwg.mxu0
        %1596 = vmatpush.bf16.xpose.msra.mxu0 %v1215
        %1597 = vmatpush.bf16.xpose.msra.mxu0 %v1209
        %1598 = vmatpush.bf16.xpose.msra.mxu0 %v1203
        %1599 = vmatpush.bf16.xpose.msra.mxu0 %v1197
        %1600 = vmatpush.bf16.xpose.msra.mxu0 %v1191
        %1601 = vmatpush.bf16.xpose.msra.mxu0 %v1185
        %1602 = vmatpush.bf16.xpose.msra.mxu0 %v1179
        %1603 = vmatpush.bf16.xpose.msra.mxu0 %v1173
        %1604 = vmatmul.bf16.gmra.mxu0 %v389
        %v1605 = vpop.f32.mrf.mxu0
        %v1606 = vadd.f32 %v1592, %v1605
        %v1607 = vpop.f32.mrf.mxu0
        %v1608 = vadd.f32 %v1594, %v1607
        %1609 = vdwg.mxu0
        %1610 = vmatpush.bf16.xpose.msra.mxu0 %v1216
        %1611 = vmatpush.bf16.xpose.msra.mxu0 %v1210
        %1612 = vmatpush.bf16.xpose.msra.mxu0 %v1204
        %1613 = vmatpush.bf16.xpose.msra.mxu0 %v1198
        %1614 = vmatpush.bf16.xpose.msra.mxu0 %v1192
        %1615 = vmatpush.bf16.xpose.msra.mxu0 %v1186
        %1616 = vmatpush.bf16.xpose.msra.mxu0 %v1180
        %1617 = vmatpush.bf16.xpose.msra.mxu0 %v1174
        %1618 = vmatmul.bf16.gmra.mxu0 %v390
        %v1619 = vpop.f32.mrf.mxu0
        %v1620 = vadd.f32 %v1606, %v1619
        %v1621 = vpop.f32.mrf.mxu0
        %v1622 = vadd.f32 %v1608, %v1621
        %1623 = vdwg.mxu0
        %1624 = vmatpush.bf16.xpose.msra.mxu0 %v1217
        %1625 = vmatpush.bf16.xpose.msra.mxu0 %v1211
        %1626 = vmatpush.bf16.xpose.msra.mxu0 %v1205
        %1627 = vmatpush.bf16.xpose.msra.mxu0 %v1199
        %1628 = vmatpush.bf16.xpose.msra.mxu0 %v1193
        %1629 = vmatpush.bf16.xpose.msra.mxu0 %v1187
        %1630 = vmatpush.bf16.xpose.msra.mxu0 %v1181
        %1631 = vmatpush.bf16.xpose.msra.mxu0 %v1175
        %1632 = vmatmul.bf16.gmra.mxu0 %v391
        %v1633 = vpop.f32.mrf.mxu0
        %v1634 = vadd.f32 %v1620, %v1633
        %v1635 = vpop.f32.mrf.mxu0
        %v1636 = vadd.f32 %v1622, %v1635
        %1637 = vdwg.mxu0
        %1638 = vmatpush.bf16.xpose.msra.mxu0 %v1260
        %1639 = vmatpush.bf16.xpose.msra.mxu0 %v1254
        %1640 = vmatpush.bf16.xpose.msra.mxu0 %v1248
        %1641 = vmatpush.bf16.xpose.msra.mxu0 %v1242
        %1642 = vmatpush.bf16.xpose.msra.mxu0 %v1236
        %1643 = vmatpush.bf16.xpose.msra.mxu0 %v1230
        %1644 = vmatpush.bf16.xpose.msra.mxu0 %v1224
        %1645 = vmatpush.bf16.xpose.msra.mxu0 %v1218
        %1646 = vmatmul.bf16.gmra.mxu0 %v386
        %v1647 = vpop.f32.mrf.mxu0
        %v1648 = vadd.f32 %v587, %v1647
        %v1649 = vpop.f32.mrf.mxu0
        %v1650 = vadd.f32 %v587, %v1649
        %1651 = vdwg.mxu0
        %1652 = vmatpush.bf16.xpose.msra.mxu0 %v1261
        %1653 = vmatpush.bf16.xpose.msra.mxu0 %v1255
        %1654 = vmatpush.bf16.xpose.msra.mxu0 %v1249
        %1655 = vmatpush.bf16.xpose.msra.mxu0 %v1243
        %1656 = vmatpush.bf16.xpose.msra.mxu0 %v1237
        %1657 = vmatpush.bf16.xpose.msra.mxu0 %v1231
        %1658 = vmatpush.bf16.xpose.msra.mxu0 %v1225
        %1659 = vmatpush.bf16.xpose.msra.mxu0 %v1219
        %1660 = vmatmul.bf16.gmra.mxu0 %v387
        %v1661 = vpop.f32.mrf.mxu0
        %v1662 = vadd.f32 %v1648, %v1661
        %v1663 = vpop.f32.mrf.mxu0
        %v1664 = vadd.f32 %v1650, %v1663
        %1665 = vdwg.mxu0
        %1666 = vmatpush.bf16.xpose.msra.mxu0 %v1262
        %1667 = vmatpush.bf16.xpose.msra.mxu0 %v1256
        %1668 = vmatpush.bf16.xpose.msra.mxu0 %v1250
        %1669 = vmatpush.bf16.xpose.msra.mxu0 %v1244
        %1670 = vmatpush.bf16.xpose.msra.mxu0 %v1238
        %1671 = vmatpush.bf16.xpose.msra.mxu0 %v1232
        %1672 = vmatpush.bf16.xpose.msra.mxu0 %v1226
        %1673 = vmatpush.bf16.xpose.msra.mxu0 %v1220
        %1674 = vmatmul.bf16.gmra.mxu0 %v388
        %v1675 = vpop.f32.mrf.mxu0
        %v1676 = vadd.f32 %v1662, %v1675
        %v1677 = vpop.f32.mrf.mxu0
        %v1678 = vadd.f32 %v1664, %v1677
        %1679 = vdwg.mxu0
        %1680 = vmatpush.bf16.xpose.msra.mxu0 %v1263
        %1681 = vmatpush.bf16.xpose.msra.mxu0 %v1257
        %1682 = vmatpush.bf16.xpose.msra.mxu0 %v1251
        %1683 = vmatpush.bf16.xpose.msra.mxu0 %v1245
        %1684 = vmatpush.bf16.xpose.msra.mxu0 %v1239
        %1685 = vmatpush.bf16.xpose.msra.mxu0 %v1233
        %1686 = vmatpush.bf16.xpose.msra.mxu0 %v1227
        %1687 = vmatpush.bf16.xpose.msra.mxu0 %v1221
        %1688 = vmatmul.bf16.gmra.mxu0 %v389
        %v1689 = vpop.f32.mrf.mxu0
        %v1690 = vadd.f32 %v1676, %v1689
        %v1691 = vpop.f32.mrf.mxu0
        %v1692 = vadd.f32 %v1678, %v1691
        %1693 = vdwg.mxu0
        %1694 = vmatpush.bf16.xpose.msra.mxu0 %v1264
        %1695 = vmatpush.bf16.xpose.msra.mxu0 %v1258
        %1696 = vmatpush.bf16.xpose.msra.mxu0 %v1252
        %1697 = vmatpush.bf16.xpose.msra.mxu0 %v1246
        %1698 = vmatpush.bf16.xpose.msra.mxu0 %v1240
        %1699 = vmatpush.bf16.xpose.msra.mxu0 %v1234
        %1700 = vmatpush.bf16.xpose.msra.mxu0 %v1228
        %1701 = vmatpush.bf16.xpose.msra.mxu0 %v1222
        %1702 = vmatmul.bf16.gmra.mxu0 %v390
        %v1703 = vpop.f32.mrf.mxu0
        %v1704 = vadd.f32 %v1690, %v1703
        %v1705 = vpop.f32.mrf.mxu0
        %v1706 = vadd.f32 %v1692, %v1705
        %1707 = vdwg.mxu0
        %1708 = vmatpush.bf16.xpose.msra.mxu0 %v1265
        %1709 = vmatpush.bf16.xpose.msra.mxu0 %v1259
        %1710 = vmatpush.bf16.xpose.msra.mxu0 %v1253
        %1711 = vmatpush.bf16.xpose.msra.mxu0 %v1247
        %1712 = vmatpush.bf16.xpose.msra.mxu0 %v1241
        %1713 = vmatpush.bf16.xpose.msra.mxu0 %v1235
        %1714 = vmatpush.bf16.xpose.msra.mxu0 %v1229
        %1715 = vmatpush.bf16.xpose.msra.mxu0 %v1223
        %1716 = vmatmul.bf16.gmra.mxu0 %v391
        %v1717 = vpop.f32.mrf.mxu0
        %v1718 = vadd.f32 %v1704, %v1717
        %v1719 = vpop.f32.mrf.mxu0
        %v1720 = vadd.f32 %v1706, %v1719
        %1721 = vdwg.mxu0
        %1722 = vmatpush.bf16.xpose.msra.mxu0 %v1308
        %1723 = vmatpush.bf16.xpose.msra.mxu0 %v1302
        %1724 = vmatpush.bf16.xpose.msra.mxu0 %v1296
        %1725 = vmatpush.bf16.xpose.msra.mxu0 %v1290
        %1726 = vmatpush.bf16.xpose.msra.mxu0 %v1284
        %1727 = vmatpush.bf16.xpose.msra.mxu0 %v1278
        %1728 = vmatpush.bf16.xpose.msra.mxu0 %v1272
        %1729 = vmatpush.bf16.xpose.msra.mxu0 %v1266
        %1730 = vmatmul.bf16.gmra.mxu0 %v386
        %v1731 = vpop.f32.mrf.mxu0
        %v1732 = vadd.f32 %v588, %v1731
        %v1733 = vpop.f32.mrf.mxu0
        %v1734 = vadd.f32 %v588, %v1733
        %1735 = vdwg.mxu0
        %1736 = vmatpush.bf16.xpose.msra.mxu0 %v1309
        %1737 = vmatpush.bf16.xpose.msra.mxu0 %v1303
        %1738 = vmatpush.bf16.xpose.msra.mxu0 %v1297
        %1739 = vmatpush.bf16.xpose.msra.mxu0 %v1291
        %1740 = vmatpush.bf16.xpose.msra.mxu0 %v1285
        %1741 = vmatpush.bf16.xpose.msra.mxu0 %v1279
        %1742 = vmatpush.bf16.xpose.msra.mxu0 %v1273
        %1743 = vmatpush.bf16.xpose.msra.mxu0 %v1267
        %1744 = vmatmul.bf16.gmra.mxu0 %v387
        %v1745 = vpop.f32.mrf.mxu0
        %v1746 = vadd.f32 %v1732, %v1745
        %v1747 = vpop.f32.mrf.mxu0
        %v1748 = vadd.f32 %v1734, %v1747
        %1749 = vdwg.mxu0
        %1750 = vmatpush.bf16.xpose.msra.mxu0 %v1310
        %1751 = vmatpush.bf16.xpose.msra.mxu0 %v1304
        %1752 = vmatpush.bf16.xpose.msra.mxu0 %v1298
        %1753 = vmatpush.bf16.xpose.msra.mxu0 %v1292
        %1754 = vmatpush.bf16.xpose.msra.mxu0 %v1286
        %1755 = vmatpush.bf16.xpose.msra.mxu0 %v1280
        %1756 = vmatpush.bf16.xpose.msra.mxu0 %v1274
        %1757 = vmatpush.bf16.xpose.msra.mxu0 %v1268
        %1758 = vmatmul.bf16.gmra.mxu0 %v388
        %v1759 = vpop.f32.mrf.mxu0
        %v1760 = vadd.f32 %v1746, %v1759
        %v1761 = vpop.f32.mrf.mxu0
        %v1762 = vadd.f32 %v1748, %v1761
        %1763 = vdwg.mxu0
        %1764 = vmatpush.bf16.xpose.msra.mxu0 %v1311
        %1765 = vmatpush.bf16.xpose.msra.mxu0 %v1305
        %1766 = vmatpush.bf16.xpose.msra.mxu0 %v1299
        %1767 = vmatpush.bf16.xpose.msra.mxu0 %v1293
        %1768 = vmatpush.bf16.xpose.msra.mxu0 %v1287
        %1769 = vmatpush.bf16.xpose.msra.mxu0 %v1281
        %1770 = vmatpush.bf16.xpose.msra.mxu0 %v1275
        %1771 = vmatpush.bf16.xpose.msra.mxu0 %v1269
        %1772 = vmatmul.bf16.gmra.mxu0 %v389
        %v1773 = vpop.f32.mrf.mxu0
        %v1774 = vadd.f32 %v1760, %v1773
        %v1775 = vpop.f32.mrf.mxu0
        %v1776 = vadd.f32 %v1762, %v1775
        %1777 = vdwg.mxu0
        %1778 = vmatpush.bf16.xpose.msra.mxu0 %v1312
        %1779 = vmatpush.bf16.xpose.msra.mxu0 %v1306
        %1780 = vmatpush.bf16.xpose.msra.mxu0 %v1300
        %1781 = vmatpush.bf16.xpose.msra.mxu0 %v1294
        %1782 = vmatpush.bf16.xpose.msra.mxu0 %v1288
        %1783 = vmatpush.bf16.xpose.msra.mxu0 %v1282
        %1784 = vmatpush.bf16.xpose.msra.mxu0 %v1276
        %1785 = vmatpush.bf16.xpose.msra.mxu0 %v1270
        %1786 = vmatmul.bf16.gmra.mxu0 %v390
        %v1787 = vpop.f32.mrf.mxu0
        %v1788 = vadd.f32 %v1774, %v1787
        %v1789 = vpop.f32.mrf.mxu0
        %v1790 = vadd.f32 %v1776, %v1789
        %1791 = vdwg.mxu0
        %1792 = vmatpush.bf16.xpose.msra.mxu0 %v1313
        %1793 = vmatpush.bf16.xpose.msra.mxu0 %v1307
        %1794 = vmatpush.bf16.xpose.msra.mxu0 %v1301
        %1795 = vmatpush.bf16.xpose.msra.mxu0 %v1295
        %1796 = vmatpush.bf16.xpose.msra.mxu0 %v1289
        %1797 = vmatpush.bf16.xpose.msra.mxu0 %v1283
        %1798 = vmatpush.bf16.xpose.msra.mxu0 %v1277
        %1799 = vmatpush.bf16.xpose.msra.mxu0 %v1271
        %1800 = vmatmul.bf16.gmra.mxu0 %v391
        %v1801 = vpop.f32.mrf.mxu0
        %v1802 = vadd.f32 %v1788, %v1801
        %v1803 = vpop.f32.mrf.mxu0
        %v1804 = vadd.f32 %v1790, %v1803
        %1805 = vdwg.mxu0
        %1806 = vmatpush.bf16.xpose.msra.mxu0 %v1356
        %1807 = vmatpush.bf16.xpose.msra.mxu0 %v1350
        %1808 = vmatpush.bf16.xpose.msra.mxu0 %v1344
        %1809 = vmatpush.bf16.xpose.msra.mxu0 %v1338
        %1810 = vmatpush.bf16.xpose.msra.mxu0 %v1332
        %1811 = vmatpush.bf16.xpose.msra.mxu0 %v1326
        %1812 = vmatpush.bf16.xpose.msra.mxu0 %v1320
        %1813 = vmatpush.bf16.xpose.msra.mxu0 %v1314
        %1814 = vmatmul.bf16.gmra.mxu0 %v386
        %v1815 = vpop.f32.mrf.mxu0
        %v1816 = vadd.f32 %v589, %v1815
        %v1817 = vpop.f32.mrf.mxu0
        %v1818 = vadd.f32 %v589, %v1817
        %1819 = vdwg.mxu0
        %1820 = vmatpush.bf16.xpose.msra.mxu0 %v1357
        %1821 = vmatpush.bf16.xpose.msra.mxu0 %v1351
        %1822 = vmatpush.bf16.xpose.msra.mxu0 %v1345
        %1823 = vmatpush.bf16.xpose.msra.mxu0 %v1339
        %1824 = vmatpush.bf16.xpose.msra.mxu0 %v1333
        %1825 = vmatpush.bf16.xpose.msra.mxu0 %v1327
        %1826 = vmatpush.bf16.xpose.msra.mxu0 %v1321
        %1827 = vmatpush.bf16.xpose.msra.mxu0 %v1315
        %1828 = vmatmul.bf16.gmra.mxu0 %v387
        %v1829 = vpop.f32.mrf.mxu0
        %v1830 = vadd.f32 %v1816, %v1829
        %v1831 = vpop.f32.mrf.mxu0
        %v1832 = vadd.f32 %v1818, %v1831
        %1833 = vdwg.mxu0
        %1834 = vmatpush.bf16.xpose.msra.mxu0 %v1358
        %1835 = vmatpush.bf16.xpose.msra.mxu0 %v1352
        %1836 = vmatpush.bf16.xpose.msra.mxu0 %v1346
        %1837 = vmatpush.bf16.xpose.msra.mxu0 %v1340
        %1838 = vmatpush.bf16.xpose.msra.mxu0 %v1334
        %1839 = vmatpush.bf16.xpose.msra.mxu0 %v1328
        %1840 = vmatpush.bf16.xpose.msra.mxu0 %v1322
        %1841 = vmatpush.bf16.xpose.msra.mxu0 %v1316
        %1842 = vmatmul.bf16.gmra.mxu0 %v388
        %v1843 = vpop.f32.mrf.mxu0
        %v1844 = vadd.f32 %v1830, %v1843
        %v1845 = vpop.f32.mrf.mxu0
        %v1846 = vadd.f32 %v1832, %v1845
        %1847 = vdwg.mxu0
        %1848 = vmatpush.bf16.xpose.msra.mxu0 %v1359
        %1849 = vmatpush.bf16.xpose.msra.mxu0 %v1353
        %1850 = vmatpush.bf16.xpose.msra.mxu0 %v1347
        %1851 = vmatpush.bf16.xpose.msra.mxu0 %v1341
        %1852 = vmatpush.bf16.xpose.msra.mxu0 %v1335
        %1853 = vmatpush.bf16.xpose.msra.mxu0 %v1329
        %1854 = vmatpush.bf16.xpose.msra.mxu0 %v1323
        %1855 = vmatpush.bf16.xpose.msra.mxu0 %v1317
        %1856 = vmatmul.bf16.gmra.mxu0 %v389
        %v1857 = vpop.f32.mrf.mxu0
        %v1858 = vadd.f32 %v1844, %v1857
        %v1859 = vpop.f32.mrf.mxu0
        %v1860 = vadd.f32 %v1846, %v1859
        %1861 = vdwg.mxu0
        %1862 = vmatpush.bf16.xpose.msra.mxu0 %v1360
        %1863 = vmatpush.bf16.xpose.msra.mxu0 %v1354
        %1864 = vmatpush.bf16.xpose.msra.mxu0 %v1348
        %1865 = vmatpush.bf16.xpose.msra.mxu0 %v1342
        %1866 = vmatpush.bf16.xpose.msra.mxu0 %v1336
        %1867 = vmatpush.bf16.xpose.msra.mxu0 %v1330
        %1868 = vmatpush.bf16.xpose.msra.mxu0 %v1324
        %1869 = vmatpush.bf16.xpose.msra.mxu0 %v1318
        %1870 = vmatmul.bf16.gmra.mxu0 %v390
        %v1871 = vpop.f32.mrf.mxu0
        %v1872 = vadd.f32 %v1858, %v1871
        %v1873 = vpop.f32.mrf.mxu0
        %v1874 = vadd.f32 %v1860, %v1873
        %1875 = vdwg.mxu0
        %1876 = vmatpush.bf16.xpose.msra.mxu0 %v1361
        %1877 = vmatpush.bf16.xpose.msra.mxu0 %v1355
        %1878 = vmatpush.bf16.xpose.msra.mxu0 %v1349
        %1879 = vmatpush.bf16.xpose.msra.mxu0 %v1343
        %1880 = vmatpush.bf16.xpose.msra.mxu0 %v1337
        %1881 = vmatpush.bf16.xpose.msra.mxu0 %v1331
        %1882 = vmatpush.bf16.xpose.msra.mxu0 %v1325
        %1883 = vmatpush.bf16.xpose.msra.mxu0 %v1319
        %1884 = vmatmul.bf16.gmra.mxu0 %v391
        %v1885 = vpop.f32.mrf.mxu0
        %v1886 = vadd.f32 %v1872, %v1885
        %v1887 = vpop.f32.mrf.mxu0
        %v1888 = vadd.f32 %v1874, %v1887
        %1889 = vdwg.mxu0
        %v1890 = vmax.f32 %v1634, 0.0
        %v1891 = vmax.f32 %v1718, 0.0
        %v1892 = vmax.f32 %v1802, 0.0
        %v1893 = vmax.f32 %v1886, 0.0
        %v1894 = vmax.f32 %v1636, 0.0
        %v1895 = vmax.f32 %v1720, 0.0
        %v1896 = vmax.f32 %v1804, 0.0
        %v1897 = vmax.f32 %v1888, 0.0
        %v1898 = vpack.c.bf16 %v1894, %v1890
        %v1899 = vpack.c.bf16 %v1895, %v1891
        %v1900 = vpack.c.bf16 %v1896, %v1892
        %v1901 = vpack.c.bf16 %v1897, %v1893
        %v1902 = vld [vmem:[%s331] sm:$0xff]
        %v1903 = vld [vmem:[%s331 + $0x8] sm:$0xff]
        %v1904 = vld [vmem:[%s331 + $0x10] sm:$0xff]
        %v1905 = vld [vmem:[%s331 + $0x18] sm:$0xff]
        %v1906 = vld [vmem:[%s331 + $0x20] sm:$0xff]
        %v1907 = vld [vmem:[%s331 + $0x28] sm:$0xff]
        %v1908 = vld [vmem:[%s331 + $0x30] sm:$0xff]
        %v1909 = vld [vmem:[%s331 + $0x38] sm:$0xff]
        %v1910 = vld [vmem:[%s331 + $0x40] sm:$0xff]
        %v1911 = vld [vmem:[%s331 + $0x48] sm:$0xff]
        %v1912 = vld [vmem:[%s331 + $0x50] sm:$0xff]
        %v1913 = vld [vmem:[%s331 + $0x58] sm:$0xff]
        %v1914 = vld [vmem:[%s331 + $0x60] sm:$0xff]
        %v1915 = vld [vmem:[%s331 + $0x68] sm:$0xff]
        %v1916 = vld [vmem:[%s331 + $0x70] sm:$0xff]
        %v1917 = vld [vmem:[%s331 + $0x78] sm:$0xff]
        %v1918 = vld [vmem:[%s331 + $0x80] sm:$0xff]
        %v1919 = vld [vmem:[%s331 + $0x88] sm:$0xff]
        %v1920 = vld [vmem:[%s331 + $0x90] sm:$0xff]
        %v1921 = vld [vmem:[%s331 + $0x98] sm:$0xff]
        %v1922 = vld [vmem:[%s331 + $0xa0] sm:$0xff]
        %v1923 = vld [vmem:[%s331 + $0xa8] sm:$0xff]
        %v1924 = vld [vmem:[%s331 + $0xb0] sm:$0xff]
        %v1925 = vld [vmem:[%s331 + $0xb8] sm:$0xff]
        %v1926 = vld [vmem:[%s331 + $0xc0] sm:$0xff]
        %v1927 = vld [vmem:[%s331 + $0xc8] sm:$0xff]
        %v1928 = vld [vmem:[%s331 + $0xd0] sm:$0xff]
        %v1929 = vld [vmem:[%s331 + $0xd8] sm:$0xff]
        %v1930 = vld [vmem:[%s331 + $0xe0] sm:$0xff]
        %v1931 = vld [vmem:[%s331 + $0xe8] sm:$0xff]
        %v1932 = vld [vmem:[%s331 + $0xf0] sm:$0xff]
        %v1933 = vld [vmem:[%s331 + $0xf8] sm:$0xff]
        %v1934 = vld [vmem:[%s331 + $0x100] sm:$0xff]
        %v1935 = vld [vmem:[%s331 + $0x108] sm:$0xff]
        %v1936 = vld [vmem:[%s331 + $0x110] sm:$0xff]
        %v1937 = vld [vmem:[%s331 + $0x118] sm:$0xff]
        %v1938 = vld [vmem:[%s331 + $0x120] sm:$0xff]
        %v1939 = vld [vmem:[%s331 + $0x128] sm:$0xff]
        %v1940 = vld [vmem:[%s331 + $0x130] sm:$0xff]
        %v1941 = vld [vmem:[%s331 + $0x138] sm:$0xff]
        %v1942 = vld [vmem:[%s331 + $0x140] sm:$0xff]
        %v1943 = vld [vmem:[%s331 + $0x148] sm:$0xff]
        %v1944 = vld [vmem:[%s331 + $0x150] sm:$0xff]
        %v1945 = vld [vmem:[%s331 + $0x158] sm:$0xff]
        %v1946 = vld [vmem:[%s331 + $0x160] sm:$0xff]
        %v1947 = vld [vmem:[%s331 + $0x168] sm:$0xff]
        %v1948 = vld [vmem:[%s331 + $0x170] sm:$0xff]
        %v1949 = vld [vmem:[%s331 + $0x178] sm:$0xff]
        %v1950 = vld [vmem:[%s331 + $0x180] sm:$0xff]
        %v1951 = vld [vmem:[%s331 + $0x188] sm:$0xff]
        %v1952 = vld [vmem:[%s331 + $0x190] sm:$0xff]
        %v1953 = vld [vmem:[%s331 + $0x198] sm:$0xff]
        %v1954 = vld [vmem:[%s331 + $0x1a0] sm:$0xff]
        %v1955 = vld [vmem:[%s331 + $0x1a8] sm:$0xff]
        %v1956 = vld [vmem:[%s331 + $0x1b0] sm:$0xff]
        %v1957 = vld [vmem:[%s331 + $0x1b8] sm:$0xff]
        %v1958 = vld [vmem:[%s331 + $0x1c0] sm:$0xff]
        %v1959 = vld [vmem:[%s331 + $0x1c8] sm:$0xff]
        %v1960 = vld [vmem:[%s331 + $0x1d0] sm:$0xff]
        %v1961 = vld [vmem:[%s331 + $0x1d8] sm:$0xff]
        %v1962 = vld [vmem:[%s331 + $0x1e0] sm:$0xff]
        %v1963 = vld [vmem:[%s331 + $0x1e8] sm:$0xff]
        %v1964 = vld [vmem:[%s331 + $0x1f0] sm:$0xff]
        %v1965 = vld [vmem:[%s331 + $0x1f8] sm:$0xff]
        %v1966 = vld [vmem:[%s331 + $0x200] sm:$0xff]
        %v1967 = vld [vmem:[%s331 + $0x208] sm:$0xff]
        %v1968 = vld [vmem:[%s331 + $0x210] sm:$0xff]
        %v1969 = vld [vmem:[%s331 + $0x218] sm:$0xff]
        %v1970 = vld [vmem:[%s331 + $0x220] sm:$0xff]
        %v1971 = vld [vmem:[%s331 + $0x228] sm:$0xff]
        %v1972 = vld [vmem:[%s331 + $0x230] sm:$0xff]
        %v1973 = vld [vmem:[%s331 + $0x238] sm:$0xff]
        %v1974 = vld [vmem:[%s331 + $0x240] sm:$0xff]
        %v1975 = vld [vmem:[%s331 + $0x248] sm:$0xff]
        %v1976 = vld [vmem:[%s331 + $0x250] sm:$0xff]
        %v1977 = vld [vmem:[%s331 + $0x258] sm:$0xff]
        %v1978 = vld [vmem:[%s331 + $0x260] sm:$0xff]
        %v1979 = vld [vmem:[%s331 + $0x268] sm:$0xff]
        %v1980 = vld [vmem:[%s331 + $0x270] sm:$0xff]
        %v1981 = vld [vmem:[%s331 + $0x278] sm:$0xff]
        %v1982 = vld [vmem:[%s331 + $0x280] sm:$0xff]
        %v1983 = vld [vmem:[%s331 + $0x288] sm:$0xff]
        %v1984 = vld [vmem:[%s331 + $0x290] sm:$0xff]
        %v1985 = vld [vmem:[%s331 + $0x298] sm:$0xff]
        %v1986 = vld [vmem:[%s331 + $0x2a0] sm:$0xff]
        %v1987 = vld [vmem:[%s331 + $0x2a8] sm:$0xff]
        %v1988 = vld [vmem:[%s331 + $0x2b0] sm:$0xff]
        %v1989 = vld [vmem:[%s331 + $0x2b8] sm:$0xff]
        %v1990 = vld [vmem:[%s331 + $0x2c0] sm:$0xff]
        %v1991 = vld [vmem:[%s331 + $0x2c8] sm:$0xff]
        %v1992 = vld [vmem:[%s331 + $0x2d0] sm:$0xff]
        %v1993 = vld [vmem:[%s331 + $0x2d8] sm:$0xff]
        %v1994 = vld [vmem:[%s331 + $0x2e0] sm:$0xff]
        %v1995 = vld [vmem:[%s331 + $0x2e8] sm:$0xff]
        %v1996 = vld [vmem:[%s331 + $0x2f0] sm:$0xff]
        %v1997 = vld [vmem:[%s331 + $0x2f8] sm:$0xff]
        %v1998 = vld [vmem:[%s331 + $0x300] sm:$0xff]
        %v1999 = vld [vmem:[%s331 + $0x308] sm:$0xff]
        %v2000 = vld [vmem:[%s331 + $0x310] sm:$0xff]
        %v2001 = vld [vmem:[%s331 + $0x318] sm:$0xff]
        %v2002 = vld [vmem:[%s331 + $0x320] sm:$0xff]
        %v2003 = vld [vmem:[%s331 + $0x328] sm:$0xff]
        %v2004 = vld [vmem:[%s331 + $0x330] sm:$0xff]
        %v2005 = vld [vmem:[%s331 + $0x338] sm:$0xff]
        %v2006 = vld [vmem:[%s331 + $0x340] sm:$0xff]
        %v2007 = vld [vmem:[%s331 + $0x348] sm:$0xff]
        %v2008 = vld [vmem:[%s331 + $0x350] sm:$0xff]
        %v2009 = vld [vmem:[%s331 + $0x358] sm:$0xff]
        %v2010 = vld [vmem:[%s331 + $0x360] sm:$0xff]
        %v2011 = vld [vmem:[%s331 + $0x368] sm:$0xff]
        %v2012 = vld [vmem:[%s331 + $0x370] sm:$0xff]
        %v2013 = vld [vmem:[%s331 + $0x378] sm:$0xff]
        %v2014 = vld [vmem:[%s331 + $0x380] sm:$0xff]
        %v2015 = vld [vmem:[%s331 + $0x388] sm:$0xff]
        %v2016 = vld [vmem:[%s331 + $0x390] sm:$0xff]
        %v2017 = vld [vmem:[%s331 + $0x398] sm:$0xff]
        %v2018 = vld [vmem:[%s331 + $0x3a0] sm:$0xff]
        %v2019 = vld [vmem:[%s331 + $0x3a8] sm:$0xff]
        %v2020 = vld [vmem:[%s331 + $0x3b0] sm:$0xff]
        %v2021 = vld [vmem:[%s331 + $0x3b8] sm:$0xff]
        %v2022 = vld [vmem:[%s331 + $0x3c0] sm:$0xff]
        %v2023 = vld [vmem:[%s331 + $0x3c8] sm:$0xff]
        %v2024 = vld [vmem:[%s331 + $0x3d0] sm:$0xff]
        %v2025 = vld [vmem:[%s331 + $0x3d8] sm:$0xff]
        %v2026 = vld [vmem:[%s331 + $0x3e0] sm:$0xff]
        %v2027 = vld [vmem:[%s331 + $0x3e8] sm:$0xff]
        %v2028 = vld [vmem:[%s331 + $0x3f0] sm:$0xff]
        %v2029 = vld [vmem:[%s331 + $0x3f8] sm:$0xff]
        %v2030 = vld [vmem:[%s331 + $0x400] sm:$0xff]
        %v2031 = vld [vmem:[%s331 + $0x408] sm:$0xff]
        %v2032 = vld [vmem:[%s331 + $0x410] sm:$0xff]
        %v2033 = vld [vmem:[%s331 + $0x418] sm:$0xff]
        %v2034 = vld [vmem:[%s331 + $0x420] sm:$0xff]
        %v2035 = vld [vmem:[%s331 + $0x428] sm:$0xff]
        %v2036 = vld [vmem:[%s331 + $0x430] sm:$0xff]
        %v2037 = vld [vmem:[%s331 + $0x438] sm:$0xff]
        %v2038 = vld [vmem:[%s331 + $0x440] sm:$0xff]
        %v2039 = vld [vmem:[%s331 + $0x448] sm:$0xff]
        %v2040 = vld [vmem:[%s331 + $0x450] sm:$0xff]
        %v2041 = vld [vmem:[%s331 + $0x458] sm:$0xff]
        %v2042 = vld [vmem:[%s331 + $0x460] sm:$0xff]
        %v2043 = vld [vmem:[%s331 + $0x468] sm:$0xff]
        %v2044 = vld [vmem:[%s331 + $0x470] sm:$0xff]
        %v2045 = vld [vmem:[%s331 + $0x478] sm:$0xff]
        %v2046 = vld [vmem:[%s331 + $0x480] sm:$0xff]
        %v2047 = vld [vmem:[%s331 + $0x488] sm:$0xff]
        %v2048 = vld [vmem:[%s331 + $0x490] sm:$0xff]
        %v2049 = vld [vmem:[%s331 + $0x498] sm:$0xff]
        %v2050 = vld [vmem:[%s331 + $0x4a0] sm:$0xff]
        %v2051 = vld [vmem:[%s331 + $0x4a8] sm:$0xff]
        %v2052 = vld [vmem:[%s331 + $0x4b0] sm:$0xff]
        %v2053 = vld [vmem:[%s331 + $0x4b8] sm:$0xff]
        %v2054 = vld [vmem:[%s331 + $0x4c0] sm:$0xff]
        %v2055 = vld [vmem:[%s331 + $0x4c8] sm:$0xff]
        %v2056 = vld [vmem:[%s331 + $0x4d0] sm:$0xff]
        %v2057 = vld [vmem:[%s331 + $0x4d8] sm:$0xff]
        %v2058 = vld [vmem:[%s331 + $0x4e0] sm:$0xff]
        %v2059 = vld [vmem:[%s331 + $0x4e8] sm:$0xff]
        %v2060 = vld [vmem:[%s331 + $0x4f0] sm:$0xff]
        %v2061 = vld [vmem:[%s331 + $0x4f8] sm:$0xff]
        %v2062 = vld [vmem:[%s331 + $0x500] sm:$0xff]
        %v2063 = vld [vmem:[%s331 + $0x508] sm:$0xff]
        %v2064 = vld [vmem:[%s331 + $0x510] sm:$0xff]
        %v2065 = vld [vmem:[%s331 + $0x518] sm:$0xff]
        %v2066 = vld [vmem:[%s331 + $0x520] sm:$0xff]
        %v2067 = vld [vmem:[%s331 + $0x528] sm:$0xff]
        %v2068 = vld [vmem:[%s331 + $0x530] sm:$0xff]
        %v2069 = vld [vmem:[%s331 + $0x538] sm:$0xff]
        %v2070 = vld [vmem:[%s331 + $0x540] sm:$0xff]
        %v2071 = vld [vmem:[%s331 + $0x548] sm:$0xff]
        %v2072 = vld [vmem:[%s331 + $0x550] sm:$0xff]
        %v2073 = vld [vmem:[%s331 + $0x558] sm:$0xff]
        %v2074 = vld [vmem:[%s331 + $0x560] sm:$0xff]
        %v2075 = vld [vmem:[%s331 + $0x568] sm:$0xff]
        %v2076 = vld [vmem:[%s331 + $0x570] sm:$0xff]
        %v2077 = vld [vmem:[%s331 + $0x578] sm:$0xff]
        %v2078 = vld [vmem:[%s331 + $0x580] sm:$0xff]
        %v2079 = vld [vmem:[%s331 + $0x588] sm:$0xff]
        %v2080 = vld [vmem:[%s331 + $0x590] sm:$0xff]
        %v2081 = vld [vmem:[%s331 + $0x598] sm:$0xff]
        %v2082 = vld [vmem:[%s331 + $0x5a0] sm:$0xff]
        %v2083 = vld [vmem:[%s331 + $0x5a8] sm:$0xff]
        %v2084 = vld [vmem:[%s331 + $0x5b0] sm:$0xff]
        %v2085 = vld [vmem:[%s331 + $0x5b8] sm:$0xff]
        %v2086 = vld [vmem:[%s331 + $0x5c0] sm:$0xff]
        %v2087 = vld [vmem:[%s331 + $0x5c8] sm:$0xff]
        %v2088 = vld [vmem:[%s331 + $0x5d0] sm:$0xff]
        %v2089 = vld [vmem:[%s331 + $0x5d8] sm:$0xff]
        %v2090 = vld [vmem:[%s331 + $0x5e0] sm:$0xff]
        %v2091 = vld [vmem:[%s331 + $0x5e8] sm:$0xff]
        %v2092 = vld [vmem:[%s331 + $0x5f0] sm:$0xff]
        %v2093 = vld [vmem:[%s331 + $0x5f8] sm:$0xff]
        %v2286 = vunpack.c.l.b16 %v1902
        %v2287 = vunpack.c.h.b16 %v1902
        %v2288 = vunpack.c.l.b16 %v1903
        %v2289 = vunpack.c.h.b16 %v1903
        %v2290 = vunpack.c.l.b16 %v1904
        %v2291 = vunpack.c.h.b16 %v1904
        %v2292 = vunpack.c.l.b16 %v1905
        %v2293 = vunpack.c.h.b16 %v1905
        %v2294 = vunpack.c.l.b16 %v1906
        %v2295 = vunpack.c.h.b16 %v1906
        %v2296 = vunpack.c.l.b16 %v1907
        %v2297 = vunpack.c.h.b16 %v1907
        %v2298 = vunpack.c.l.b16 %v1908
        %v2299 = vunpack.c.h.b16 %v1908
        %v2300 = vunpack.c.l.b16 %v1909
        %v2301 = vunpack.c.h.b16 %v1909
        %v2302 = vunpack.c.l.b16 %v1910
        %v2303 = vunpack.c.h.b16 %v1910
        %v2304 = vunpack.c.l.b16 %v1911
        %v2305 = vunpack.c.h.b16 %v1911
        %v2306 = vunpack.c.l.b16 %v1912
        %v2307 = vunpack.c.h.b16 %v1912
        %v2308 = vunpack.c.l.b16 %v1913
        %v2309 = vunpack.c.h.b16 %v1913
        %v2310 = vunpack.c.l.b16 %v1914
        %v2311 = vunpack.c.h.b16 %v1914
        %v2312 = vunpack.c.l.b16 %v1915
        %v2313 = vunpack.c.h.b16 %v1915
        %v2314 = vunpack.c.l.b16 %v1916
        %v2315 = vunpack.c.h.b16 %v1916
        %v2316 = vunpack.c.l.b16 %v1917
        %v2317 = vunpack.c.h.b16 %v1917
        %v2318 = vunpack.c.l.b16 %v1918
        %v2319 = vunpack.c.h.b16 %v1918
        %v2320 = vunpack.c.l.b16 %v1919
        %v2321 = vunpack.c.h.b16 %v1919
        %v2322 = vunpack.c.l.b16 %v1920
        %v2323 = vunpack.c.h.b16 %v1920
        %v2324 = vunpack.c.l.b16 %v1921
        %v2325 = vunpack.c.h.b16 %v1921
        %v2326 = vunpack.c.l.b16 %v1922
        %v2327 = vunpack.c.h.b16 %v1922
        %v2328 = vunpack.c.l.b16 %v1923
        %v2329 = vunpack.c.h.b16 %v1923
        %v2330 = vunpack.c.l.b16 %v1924
        %v2331 = vunpack.c.h.b16 %v1924
        %v2332 = vunpack.c.l.b16 %v1925
        %v2333 = vunpack.c.h.b16 %v1925
        %v2334 = vunpack.c.l.b16 %v1926
        %v2335 = vunpack.c.h.b16 %v1926
        %v2336 = vunpack.c.l.b16 %v1927
        %v2337 = vunpack.c.h.b16 %v1927
        %v2338 = vunpack.c.l.b16 %v1928
        %v2339 = vunpack.c.h.b16 %v1928
        %v2340 = vunpack.c.l.b16 %v1929
        %v2341 = vunpack.c.h.b16 %v1929
        %v2342 = vunpack.c.l.b16 %v1930
        %v2343 = vunpack.c.h.b16 %v1930
        %v2344 = vunpack.c.l.b16 %v1931
        %v2345 = vunpack.c.h.b16 %v1931
        %v2346 = vunpack.c.l.b16 %v1932
        %v2347 = vunpack.c.h.b16 %v1932
        %v2348 = vunpack.c.l.b16 %v1933
        %v2349 = vunpack.c.h.b16 %v1933
        %v2350 = vunpack.c.l.b16 %v1934
        %v2351 = vunpack.c.h.b16 %v1934
        %v2352 = vunpack.c.l.b16 %v1935
        %v2353 = vunpack.c.h.b16 %v1935
        %v2354 = vunpack.c.l.b16 %v1936
        %v2355 = vunpack.c.h.b16 %v1936
        %v2356 = vunpack.c.l.b16 %v1937
        %v2357 = vunpack.c.h.b16 %v1937
        %v2358 = vunpack.c.l.b16 %v1938
        %v2359 = vunpack.c.h.b16 %v1938
        %v2360 = vunpack.c.l.b16 %v1939
        %v2361 = vunpack.c.h.b16 %v1939
        %v2362 = vunpack.c.l.b16 %v1940
        %v2363 = vunpack.c.h.b16 %v1940
        %v2364 = vunpack.c.l.b16 %v1941
        %v2365 = vunpack.c.h.b16 %v1941
        %v2366 = vunpack.c.l.b16 %v1942
        %v2367 = vunpack.c.h.b16 %v1942
        %v2368 = vunpack.c.l.b16 %v1943
        %v2369 = vunpack.c.h.b16 %v1943
        %v2370 = vunpack.c.l.b16 %v1944
        %v2371 = vunpack.c.h.b16 %v1944
        %v2372 = vunpack.c.l.b16 %v1945
        %v2373 = vunpack.c.h.b16 %v1945
        %v2374 = vunpack.c.l.b16 %v1946
        %v2375 = vunpack.c.h.b16 %v1946
        %v2376 = vunpack.c.l.b16 %v1947
        %v2377 = vunpack.c.h.b16 %v1947
        %v2378 = vunpack.c.l.b16 %v1948
        %v2379 = vunpack.c.h.b16 %v1948
        %v2380 = vunpack.c.l.b16 %v1949
        %v2381 = vunpack.c.h.b16 %v1949
        %v2382 = vunpack.c.l.b16 %v1950
        %v2383 = vunpack.c.h.b16 %v1950
        %v2384 = vunpack.c.l.b16 %v1951
        %v2385 = vunpack.c.h.b16 %v1951
        %v2386 = vunpack.c.l.b16 %v1952
        %v2387 = vunpack.c.h.b16 %v1952
        %v2388 = vunpack.c.l.b16 %v1953
        %v2389 = vunpack.c.h.b16 %v1953
        %v2390 = vunpack.c.l.b16 %v1954
        %v2391 = vunpack.c.h.b16 %v1954
        %v2392 = vunpack.c.l.b16 %v1955
        %v2393 = vunpack.c.h.b16 %v1955
        %v2394 = vunpack.c.l.b16 %v1956
        %v2395 = vunpack.c.h.b16 %v1956
        %v2396 = vunpack.c.l.b16 %v1957
        %v2397 = vunpack.c.h.b16 %v1957
        %v2398 = vunpack.c.l.b16 %v1958
        %v2399 = vunpack.c.h.b16 %v1958
        %v2400 = vunpack.c.l.b16 %v1959
        %v2401 = vunpack.c.h.b16 %v1959
        %v2402 = vunpack.c.l.b16 %v1960
        %v2403 = vunpack.c.h.b16 %v1960
        %v2404 = vunpack.c.l.b16 %v1961
        %v2405 = vunpack.c.h.b16 %v1961
        %v2406 = vunpack.c.l.b16 %v1962
        %v2407 = vunpack.c.h.b16 %v1962
        %v2408 = vunpack.c.l.b16 %v1963
        %v2409 = vunpack.c.h.b16 %v1963
        %v2410 = vunpack.c.l.b16 %v1964
        %v2411 = vunpack.c.h.b16 %v1964
        %v2412 = vunpack.c.l.b16 %v1965
        %v2413 = vunpack.c.h.b16 %v1965
        %v2414 = vunpack.c.l.b16 %v1966
        %v2415 = vunpack.c.h.b16 %v1966
        %v2416 = vunpack.c.l.b16 %v1967
        %v2417 = vunpack.c.h.b16 %v1967
        %v2418 = vunpack.c.l.b16 %v1968
        %v2419 = vunpack.c.h.b16 %v1968
        %v2420 = vunpack.c.l.b16 %v1969
        %v2421 = vunpack.c.h.b16 %v1969
        %v2422 = vunpack.c.l.b16 %v1970
        %v2423 = vunpack.c.h.b16 %v1970
        %v2424 = vunpack.c.l.b16 %v1971
        %v2425 = vunpack.c.h.b16 %v1971
        %v2426 = vunpack.c.l.b16 %v1972
        %v2427 = vunpack.c.h.b16 %v1972
        %v2428 = vunpack.c.l.b16 %v1973
        %v2429 = vunpack.c.h.b16 %v1973
        %v2430 = vunpack.c.l.b16 %v1974
        %v2431 = vunpack.c.h.b16 %v1974
        %v2432 = vunpack.c.l.b16 %v1975
        %v2433 = vunpack.c.h.b16 %v1975
        %v2434 = vunpack.c.l.b16 %v1976
        %v2435 = vunpack.c.h.b16 %v1976
        %v2436 = vunpack.c.l.b16 %v1977
        %v2437 = vunpack.c.h.b16 %v1977
        %v2438 = vunpack.c.l.b16 %v1978
        %v2439 = vunpack.c.h.b16 %v1978
        %v2440 = vunpack.c.l.b16 %v1979
        %v2441 = vunpack.c.h.b16 %v1979
        %v2442 = vunpack.c.l.b16 %v1980
        %v2443 = vunpack.c.h.b16 %v1980
        %v2444 = vunpack.c.l.b16 %v1981
        %v2445 = vunpack.c.h.b16 %v1981
        %v2446 = vunpack.c.l.b16 %v1982
        %v2447 = vunpack.c.h.b16 %v1982
        %v2448 = vunpack.c.l.b16 %v1983
        %v2449 = vunpack.c.h.b16 %v1983
        %v2450 = vunpack.c.l.b16 %v1984
        %v2451 = vunpack.c.h.b16 %v1984
        %v2452 = vunpack.c.l.b16 %v1985
        %v2453 = vunpack.c.h.b16 %v1985
        %v2454 = vunpack.c.l.b16 %v1986
        %v2455 = vunpack.c.h.b16 %v1986
        %v2456 = vunpack.c.l.b16 %v1987
        %v2457 = vunpack.c.h.b16 %v1987
        %v2458 = vunpack.c.l.b16 %v1988
        %v2459 = vunpack.c.h.b16 %v1988
        %v2460 = vunpack.c.l.b16 %v1989
        %v2461 = vunpack.c.h.b16 %v1989
        %v2462 = vunpack.c.l.b16 %v1990
        %v2463 = vunpack.c.h.b16 %v1990
        %v2464 = vunpack.c.l.b16 %v1991
        %v2465 = vunpack.c.h.b16 %v1991
        %v2466 = vunpack.c.l.b16 %v1992
        %v2467 = vunpack.c.h.b16 %v1992
        %v2468 = vunpack.c.l.b16 %v1993
        %v2469 = vunpack.c.h.b16 %v1993
        %v2470 = vunpack.c.l.b16 %v1994
        %v2471 = vunpack.c.h.b16 %v1994
        %v2472 = vunpack.c.l.b16 %v1995
        %v2473 = vunpack.c.h.b16 %v1995
        %v2474 = vunpack.c.l.b16 %v1996
        %v2475 = vunpack.c.h.b16 %v1996
        %v2476 = vunpack.c.l.b16 %v1997
        %v2477 = vunpack.c.h.b16 %v1997
        %v2478 = vunpack.c.l.b16 %v1998
        %v2479 = vunpack.c.h.b16 %v1998
        %v2480 = vunpack.c.l.b16 %v1999
        %v2481 = vunpack.c.h.b16 %v1999
        %v2482 = vunpack.c.l.b16 %v2000
        %v2483 = vunpack.c.h.b16 %v2000
        %v2484 = vunpack.c.l.b16 %v2001
        %v2485 = vunpack.c.h.b16 %v2001
        %v2486 = vunpack.c.l.b16 %v2002
        %v2487 = vunpack.c.h.b16 %v2002
        %v2488 = vunpack.c.l.b16 %v2003
        %v2489 = vunpack.c.h.b16 %v2003
        %v2490 = vunpack.c.l.b16 %v2004
        %v2491 = vunpack.c.h.b16 %v2004
        %v2492 = vunpack.c.l.b16 %v2005
        %v2493 = vunpack.c.h.b16 %v2005
        %v2494 = vunpack.c.l.b16 %v2006
        %v2495 = vunpack.c.h.b16 %v2006
        %v2496 = vunpack.c.l.b16 %v2007
        %v2497 = vunpack.c.h.b16 %v2007
        %v2498 = vunpack.c.l.b16 %v2008
        %v2499 = vunpack.c.h.b16 %v2008
        %v2500 = vunpack.c.l.b16 %v2009
        %v2501 = vunpack.c.h.b16 %v2009
        %v2502 = vunpack.c.l.b16 %v2010
        %v2503 = vunpack.c.h.b16 %v2010
        %v2504 = vunpack.c.l.b16 %v2011
        %v2505 = vunpack.c.h.b16 %v2011
        %v2506 = vunpack.c.l.b16 %v2012
        %v2507 = vunpack.c.h.b16 %v2012
        %v2508 = vunpack.c.l.b16 %v2013
        %v2509 = vunpack.c.h.b16 %v2013
        %v2510 = vunpack.c.l.b16 %v2014
        %v2511 = vunpack.c.h.b16 %v2014
        %v2512 = vunpack.c.l.b16 %v2015
        %v2513 = vunpack.c.h.b16 %v2015
        %v2514 = vunpack.c.l.b16 %v2016
        %v2515 = vunpack.c.h.b16 %v2016
        %v2516 = vunpack.c.l.b16 %v2017
        %v2517 = vunpack.c.h.b16 %v2017
        %v2518 = vunpack.c.l.b16 %v2018
        %v2519 = vunpack.c.h.b16 %v2018
        %v2520 = vunpack.c.l.b16 %v2019
        %v2521 = vunpack.c.h.b16 %v2019
        %v2522 = vunpack.c.l.b16 %v2020
        %v2523 = vunpack.c.h.b16 %v2020
        %v2524 = vunpack.c.l.b16 %v2021
        %v2525 = vunpack.c.h.b16 %v2021
        %v2526 = vunpack.c.l.b16 %v2022
        %v2527 = vunpack.c.h.b16 %v2022
        %v2528 = vunpack.c.l.b16 %v2023
        %v2529 = vunpack.c.h.b16 %v2023
        %v2530 = vunpack.c.l.b16 %v2024
        %v2531 = vunpack.c.h.b16 %v2024
        %v2532 = vunpack.c.l.b16 %v2025
        %v2533 = vunpack.c.h.b16 %v2025
        %v2534 = vunpack.c.l.b16 %v2026
        %v2535 = vunpack.c.h.b16 %v2026
        %v2536 = vunpack.c.l.b16 %v2027
        %v2537 = vunpack.c.h.b16 %v2027
        %v2538 = vunpack.c.l.b16 %v2028
        %v2539 = vunpack.c.h.b16 %v2028
        %v2540 = vunpack.c.l.b16 %v2029
        %v2541 = vunpack.c.h.b16 %v2029
        %v2542 = vunpack.c.l.b16 %v2030
        %v2543 = vunpack.c.h.b16 %v2030
        %v2544 = vunpack.c.l.b16 %v2031
        %v2545 = vunpack.c.h.b16 %v2031
        %v2546 = vunpack.c.l.b16 %v2032
        %v2547 = vunpack.c.h.b16 %v2032
        %v2548 = vunpack.c.l.b16 %v2033
        %v2549 = vunpack.c.h.b16 %v2033
        %v2550 = vunpack.c.l.b16 %v2034
        %v2551 = vunpack.c.h.b16 %v2034
        %v2552 = vunpack.c.l.b16 %v2035
        %v2553 = vunpack.c.h.b16 %v2035
        %v2554 = vunpack.c.l.b16 %v2036
        %v2555 = vunpack.c.h.b16 %v2036
        %v2556 = vunpack.c.l.b16 %v2037
        %v2557 = vunpack.c.h.b16 %v2037
        %v2558 = vunpack.c.l.b16 %v2038
        %v2559 = vunpack.c.h.b16 %v2038
        %v2560 = vunpack.c.l.b16 %v2039
        %v2561 = vunpack.c.h.b16 %v2039
        %v2562 = vunpack.c.l.b16 %v2040
        %v2563 = vunpack.c.h.b16 %v2040
        %v2564 = vunpack.c.l.b16 %v2041
        %v2565 = vunpack.c.h.b16 %v2041
        %v2566 = vunpack.c.l.b16 %v2042
        %v2567 = vunpack.c.h.b16 %v2042
        %v2568 = vunpack.c.l.b16 %v2043
        %v2569 = vunpack.c.h.b16 %v2043
        %v2570 = vunpack.c.l.b16 %v2044
        %v2571 = vunpack.c.h.b16 %v2044
        %v2572 = vunpack.c.l.b16 %v2045
        %v2573 = vunpack.c.h.b16 %v2045
        %v2574 = vunpack.c.l.b16 %v2046
        %v2575 = vunpack.c.h.b16 %v2046
        %v2576 = vunpack.c.l.b16 %v2047
        %v2577 = vunpack.c.h.b16 %v2047
        %v2578 = vunpack.c.l.b16 %v2048
        %v2579 = vunpack.c.h.b16 %v2048
        %v2580 = vunpack.c.l.b16 %v2049
        %v2581 = vunpack.c.h.b16 %v2049
        %v2582 = vunpack.c.l.b16 %v2050
        %v2583 = vunpack.c.h.b16 %v2050
        %v2584 = vunpack.c.l.b16 %v2051
        %v2585 = vunpack.c.h.b16 %v2051
        %v2586 = vunpack.c.l.b16 %v2052
        %v2587 = vunpack.c.h.b16 %v2052
        %v2588 = vunpack.c.l.b16 %v2053
        %v2589 = vunpack.c.h.b16 %v2053
        %v2590 = vunpack.c.l.b16 %v2054
        %v2591 = vunpack.c.h.b16 %v2054
        %v2592 = vunpack.c.l.b16 %v2055
        %v2593 = vunpack.c.h.b16 %v2055
        %v2594 = vunpack.c.l.b16 %v2056
        %v2595 = vunpack.c.h.b16 %v2056
        %v2596 = vunpack.c.l.b16 %v2057
        %v2597 = vunpack.c.h.b16 %v2057
        %v2598 = vunpack.c.l.b16 %v2058
        %v2599 = vunpack.c.h.b16 %v2058
        %v2600 = vunpack.c.l.b16 %v2059
        %v2601 = vunpack.c.h.b16 %v2059
        %v2602 = vunpack.c.l.b16 %v2060
        %v2603 = vunpack.c.h.b16 %v2060
        %v2604 = vunpack.c.l.b16 %v2061
        %v2605 = vunpack.c.h.b16 %v2061
        %v2606 = vunpack.c.l.b16 %v2062
        %v2607 = vunpack.c.h.b16 %v2062
        %v2608 = vunpack.c.l.b16 %v2063
        %v2609 = vunpack.c.h.b16 %v2063
        %v2610 = vunpack.c.l.b16 %v2064
        %v2611 = vunpack.c.h.b16 %v2064
        %v2612 = vunpack.c.l.b16 %v2065
        %v2613 = vunpack.c.h.b16 %v2065
        %v2614 = vunpack.c.l.b16 %v2066
        %v2615 = vunpack.c.h.b16 %v2066
        %v2616 = vunpack.c.l.b16 %v2067
        %v2617 = vunpack.c.h.b16 %v2067
        %v2618 = vunpack.c.l.b16 %v2068
        %v2619 = vunpack.c.h.b16 %v2068
        %v2620 = vunpack.c.l.b16 %v2069
        %v2621 = vunpack.c.h.b16 %v2069
        %v2622 = vunpack.c.l.b16 %v2070
        %v2623 = vunpack.c.h.b16 %v2070
        %v2624 = vunpack.c.l.b16 %v2071
        %v2625 = vunpack.c.h.b16 %v2071
        %v2626 = vunpack.c.l.b16 %v2072
        %v2627 = vunpack.c.h.b16 %v2072
        %v2628 = vunpack.c.l.b16 %v2073
        %v2629 = vunpack.c.h.b16 %v2073
        %v2630 = vunpack.c.l.b16 %v2074
        %v2631 = vunpack.c.h.b16 %v2074
        %v2632 = vunpack.c.l.b16 %v2075
        %v2633 = vunpack.c.h.b16 %v2075
        %v2634 = vunpack.c.l.b16 %v2076
        %v2635 = vunpack.c.h.b16 %v2076
        %v2636 = vunpack.c.l.b16 %v2077
        %v2637 = vunpack.c.h.b16 %v2077
        %v2638 = vunpack.c.l.b16 %v2078
        %v2639 = vunpack.c.h.b16 %v2078
        %v2640 = vunpack.c.l.b16 %v2079
        %v2641 = vunpack.c.h.b16 %v2079
        %v2642 = vunpack.c.l.b16 %v2080
        %v2643 = vunpack.c.h.b16 %v2080
        %v2644 = vunpack.c.l.b16 %v2081
        %v2645 = vunpack.c.h.b16 %v2081
        %v2646 = vunpack.c.l.b16 %v2082
        %v2647 = vunpack.c.h.b16 %v2082
        %v2648 = vunpack.c.l.b16 %v2083
        %v2649 = vunpack.c.h.b16 %v2083
        %v2650 = vunpack.c.l.b16 %v2084
        %v2651 = vunpack.c.h.b16 %v2084
        %v2652 = vunpack.c.l.b16 %v2085
        %v2653 = vunpack.c.h.b16 %v2085
        %v2654 = vunpack.c.l.b16 %v2086
        %v2655 = vunpack.c.h.b16 %v2086
        %v2656 = vunpack.c.l.b16 %v2087
        %v2657 = vunpack.c.h.b16 %v2087
        %v2658 = vunpack.c.l.b16 %v2088
        %v2659 = vunpack.c.h.b16 %v2088
        %v2660 = vunpack.c.l.b16 %v2089
        %v2661 = vunpack.c.h.b16 %v2089
        %v2662 = vunpack.c.l.b16 %v2090
        %v2663 = vunpack.c.h.b16 %v2090
        %v2664 = vunpack.c.l.b16 %v2091
        %v2665 = vunpack.c.h.b16 %v2091
        %v2666 = vunpack.c.l.b16 %v2092
        %v2667 = vunpack.c.h.b16 %v2092
        %v2668 = vunpack.c.l.b16 %v2093
        %v2669 = vunpack.c.h.b16 %v2093
        %v2670 = vpack.c.b16 %v2290, %v2286
        %v2671 = vpack.c.b16 %v2291, %v2287
        %v2672 = vpack.c.b16 %v2292, %v2288
        %v2673 = vpack.c.b16 %v2293, %v2289
        %v2674 = vpack.c.b16 %v2298, %v2294
        %v2675 = vpack.c.b16 %v2299, %v2295
        %v2676 = vpack.c.b16 %v2300, %v2296
        %v2677 = vpack.c.b16 %v2301, %v2297
        %v2678 = vpack.c.b16 %v2306, %v2302
        %v2679 = vpack.c.b16 %v2307, %v2303
        %v2680 = vpack.c.b16 %v2308, %v2304
        %v2681 = vpack.c.b16 %v2309, %v2305
        %v2682 = vpack.c.b16 %v2314, %v2310
        %v2683 = vpack.c.b16 %v2315, %v2311
        %v2684 = vpack.c.b16 %v2316, %v2312
        %v2685 = vpack.c.b16 %v2317, %v2313
        %v2686 = vpack.c.b16 %v2322, %v2318
        %v2687 = vpack.c.b16 %v2323, %v2319
        %v2688 = vpack.c.b16 %v2324, %v2320
        %v2689 = vpack.c.b16 %v2325, %v2321
        %v2690 = vpack.c.b16 %v2330, %v2326
        %v2691 = vpack.c.b16 %v2331, %v2327
        %v2692 = vpack.c.b16 %v2332, %v2328
        %v2693 = vpack.c.b16 %v2333, %v2329
        %v2694 = vpack.c.b16 %v2338, %v2334
        %v2695 = vpack.c.b16 %v2339, %v2335
        %v2696 = vpack.c.b16 %v2340, %v2336
        %v2697 = vpack.c.b16 %v2341, %v2337
        %v2698 = vpack.c.b16 %v2346, %v2342
        %v2699 = vpack.c.b16 %v2347, %v2343
        %v2700 = vpack.c.b16 %v2348, %v2344
        %v2701 = vpack.c.b16 %v2349, %v2345
        %v2702 = vpack.c.b16 %v2354, %v2350
        %v2703 = vpack.c.b16 %v2355, %v2351
        %v2704 = vpack.c.b16 %v2356, %v2352
        %v2705 = vpack.c.b16 %v2357, %v2353
        %v2706 = vpack.c.b16 %v2362, %v2358
        %v2707 = vpack.c.b16 %v2363, %v2359
        %v2708 = vpack.c.b16 %v2364, %v2360
        %v2709 = vpack.c.b16 %v2365, %v2361
        %v2710 = vpack.c.b16 %v2370, %v2366
        %v2711 = vpack.c.b16 %v2371, %v2367
        %v2712 = vpack.c.b16 %v2372, %v2368
        %v2713 = vpack.c.b16 %v2373, %v2369
        %v2714 = vpack.c.b16 %v2378, %v2374
        %v2715 = vpack.c.b16 %v2379, %v2375
        %v2716 = vpack.c.b16 %v2380, %v2376
        %v2717 = vpack.c.b16 %v2381, %v2377
        %v2718 = vpack.c.b16 %v2386, %v2382
        %v2719 = vpack.c.b16 %v2387, %v2383
        %v2720 = vpack.c.b16 %v2388, %v2384
        %v2721 = vpack.c.b16 %v2389, %v2385
        %v2722 = vpack.c.b16 %v2394, %v2390
        %v2723 = vpack.c.b16 %v2395, %v2391
        %v2724 = vpack.c.b16 %v2396, %v2392
        %v2725 = vpack.c.b16 %v2397, %v2393
        %v2726 = vpack.c.b16 %v2402, %v2398
        %v2727 = vpack.c.b16 %v2403, %v2399
        %v2728 = vpack.c.b16 %v2404, %v2400
        %v2729 = vpack.c.b16 %v2405, %v2401
        %v2730 = vpack.c.b16 %v2410, %v2406
        %v2731 = vpack.c.b16 %v2411, %v2407
        %v2732 = vpack.c.b16 %v2412, %v2408
        %v2733 = vpack.c.b16 %v2413, %v2409
        %v2734 = vpack.c.b16 %v2418, %v2414
        %v2735 = vpack.c.b16 %v2419, %v2415
        %v2736 = vpack.c.b16 %v2420, %v2416
        %v2737 = vpack.c.b16 %v2421, %v2417
        %v2738 = vpack.c.b16 %v2426, %v2422
        %v2739 = vpack.c.b16 %v2427, %v2423
        %v2740 = vpack.c.b16 %v2428, %v2424
        %v2741 = vpack.c.b16 %v2429, %v2425
        %v2742 = vpack.c.b16 %v2434, %v2430
        %v2743 = vpack.c.b16 %v2435, %v2431
        %v2744 = vpack.c.b16 %v2436, %v2432
        %v2745 = vpack.c.b16 %v2437, %v2433
        %v2746 = vpack.c.b16 %v2442, %v2438
        %v2747 = vpack.c.b16 %v2443, %v2439
        %v2748 = vpack.c.b16 %v2444, %v2440
        %v2749 = vpack.c.b16 %v2445, %v2441
        %v2750 = vpack.c.b16 %v2450, %v2446
        %v2751 = vpack.c.b16 %v2451, %v2447
        %v2752 = vpack.c.b16 %v2452, %v2448
        %v2753 = vpack.c.b16 %v2453, %v2449
        %v2754 = vpack.c.b16 %v2458, %v2454
        %v2755 = vpack.c.b16 %v2459, %v2455
        %v2756 = vpack.c.b16 %v2460, %v2456
        %v2757 = vpack.c.b16 %v2461, %v2457
        %v2758 = vpack.c.b16 %v2466, %v2462
        %v2759 = vpack.c.b16 %v2467, %v2463
        %v2760 = vpack.c.b16 %v2468, %v2464
        %v2761 = vpack.c.b16 %v2469, %v2465
        %v2762 = vpack.c.b16 %v2474, %v2470
        %v2763 = vpack.c.b16 %v2475, %v2471
        %v2764 = vpack.c.b16 %v2476, %v2472
        %v2765 = vpack.c.b16 %v2477, %v2473
        %v2766 = vpack.c.b16 %v2482, %v2478
        %v2767 = vpack.c.b16 %v2483, %v2479
        %v2768 = vpack.c.b16 %v2484, %v2480
        %v2769 = vpack.c.b16 %v2485, %v2481
        %v2770 = vpack.c.b16 %v2490, %v2486
        %v2771 = vpack.c.b16 %v2491, %v2487
        %v2772 = vpack.c.b16 %v2492, %v2488
        %v2773 = vpack.c.b16 %v2493, %v2489
        %v2774 = vpack.c.b16 %v2498, %v2494
        %v2775 = vpack.c.b16 %v2499, %v2495
        %v2776 = vpack.c.b16 %v2500, %v2496
        %v2777 = vpack.c.b16 %v2501, %v2497
        %v2778 = vpack.c.b16 %v2506, %v2502
        %v2779 = vpack.c.b16 %v2507, %v2503
        %v2780 = vpack.c.b16 %v2508, %v2504
        %v2781 = vpack.c.b16 %v2509, %v2505
        %v2782 = vpack.c.b16 %v2514, %v2510
        %v2783 = vpack.c.b16 %v2515, %v2511
        %v2784 = vpack.c.b16 %v2516, %v2512
        %v2785 = vpack.c.b16 %v2517, %v2513
        %v2786 = vpack.c.b16 %v2522, %v2518
        %v2787 = vpack.c.b16 %v2523, %v2519
        %v2788 = vpack.c.b16 %v2524, %v2520
        %v2789 = vpack.c.b16 %v2525, %v2521
        %v2790 = vpack.c.b16 %v2530, %v2526
        %v2791 = vpack.c.b16 %v2531, %v2527
        %v2792 = vpack.c.b16 %v2532, %v2528
        %v2793 = vpack.c.b16 %v2533, %v2529
        %v2794 = vpack.c.b16 %v2538, %v2534
        %v2795 = vpack.c.b16 %v2539, %v2535
        %v2796 = vpack.c.b16 %v2540, %v2536
        %v2797 = vpack.c.b16 %v2541, %v2537
        %v2798 = vpack.c.b16 %v2546, %v2542
        %v2799 = vpack.c.b16 %v2547, %v2543
        %v2800 = vpack.c.b16 %v2548, %v2544
        %v2801 = vpack.c.b16 %v2549, %v2545
        %v2802 = vpack.c.b16 %v2554, %v2550
        %v2803 = vpack.c.b16 %v2555, %v2551
        %v2804 = vpack.c.b16 %v2556, %v2552
        %v2805 = vpack.c.b16 %v2557, %v2553
        %v2806 = vpack.c.b16 %v2562, %v2558
        %v2807 = vpack.c.b16 %v2563, %v2559
        %v2808 = vpack.c.b16 %v2564, %v2560
        %v2809 = vpack.c.b16 %v2565, %v2561
        %v2810 = vpack.c.b16 %v2570, %v2566
        %v2811 = vpack.c.b16 %v2571, %v2567
        %v2812 = vpack.c.b16 %v2572, %v2568
        %v2813 = vpack.c.b16 %v2573, %v2569
        %v2814 = vpack.c.b16 %v2578, %v2574
        %v2815 = vpack.c.b16 %v2579, %v2575
        %v2816 = vpack.c.b16 %v2580, %v2576
        %v2817 = vpack.c.b16 %v2581, %v2577
        %v2818 = vpack.c.b16 %v2586, %v2582
        %v2819 = vpack.c.b16 %v2587, %v2583
        %v2820 = vpack.c.b16 %v2588, %v2584
        %v2821 = vpack.c.b16 %v2589, %v2585
        %v2822 = vpack.c.b16 %v2594, %v2590
        %v2823 = vpack.c.b16 %v2595, %v2591
        %v2824 = vpack.c.b16 %v2596, %v2592
        %v2825 = vpack.c.b16 %v2597, %v2593
        %v2826 = vpack.c.b16 %v2602, %v2598
        %v2827 = vpack.c.b16 %v2603, %v2599
        %v2828 = vpack.c.b16 %v2604, %v2600
        %v2829 = vpack.c.b16 %v2605, %v2601
        %v2830 = vpack.c.b16 %v2610, %v2606
        %v2831 = vpack.c.b16 %v2611, %v2607
        %v2832 = vpack.c.b16 %v2612, %v2608
        %v2833 = vpack.c.b16 %v2613, %v2609
        %v2834 = vpack.c.b16 %v2618, %v2614
        %v2835 = vpack.c.b16 %v2619, %v2615
        %v2836 = vpack.c.b16 %v2620, %v2616
        %v2837 = vpack.c.b16 %v2621, %v2617
        %v2838 = vpack.c.b16 %v2626, %v2622
        %v2839 = vpack.c.b16 %v2627, %v2623
        %v2840 = vpack.c.b16 %v2628, %v2624
        %v2841 = vpack.c.b16 %v2629, %v2625
        %v2842 = vpack.c.b16 %v2634, %v2630
        %v2843 = vpack.c.b16 %v2635, %v2631
        %v2844 = vpack.c.b16 %v2636, %v2632
        %v2845 = vpack.c.b16 %v2637, %v2633
        %v2846 = vpack.c.b16 %v2642, %v2638
        %v2847 = vpack.c.b16 %v2643, %v2639
        %v2848 = vpack.c.b16 %v2644, %v2640
        %v2849 = vpack.c.b16 %v2645, %v2641
        %v2850 = vpack.c.b16 %v2650, %v2646
        %v2851 = vpack.c.b16 %v2651, %v2647
        %v2852 = vpack.c.b16 %v2652, %v2648
        %v2853 = vpack.c.b16 %v2653, %v2649
        %v2854 = vpack.c.b16 %v2658, %v2654
        %v2855 = vpack.c.b16 %v2659, %v2655
        %v2856 = vpack.c.b16 %v2660, %v2656
        %v2857 = vpack.c.b16 %v2661, %v2657
        %v2858 = vpack.c.b16 %v2666, %v2662
        %v2859 = vpack.c.b16 %v2667, %v2663
        %v2860 = vpack.c.b16 %v2668, %v2664
        %v2861 = vpack.c.b16 %v2669, %v2665
        %3054 = vmatpush.bf16.xpose.msra.mxu0 %v2698
        %3055 = vmatpush.bf16.xpose.msra.mxu0 %v2694
        %3056 = vmatpush.bf16.xpose.msra.mxu0 %v2690
        %3057 = vmatpush.bf16.xpose.msra.mxu0 %v2686
        %3058 = vmatpush.bf16.xpose.msra.mxu0 %v2682
        %3059 = vmatpush.bf16.xpose.msra.mxu0 %v2678
        %3060 = vmatpush.bf16.xpose.msra.mxu0 %v2674
        %3061 = vmatpush.bf16.xpose.msra.mxu0 %v2670
        %3062 = vmatmul.bf16.gmra.mxu0 %v1898
        %v3063 = vpop.f32.mrf.mxu0
        %v3064 = vadd.f32 0.0, %v3063
        %v3065 = vpop.f32.mrf.mxu0
        %v3066 = vadd.f32 0.0, %v3065
        %3067 = vdwg.mxu0
        %3068 = vmatpush.bf16.xpose.msra.mxu0 %v2699
        %3069 = vmatpush.bf16.xpose.msra.mxu0 %v2695
        %3070 = vmatpush.bf16.xpose.msra.mxu0 %v2691
        %3071 = vmatpush.bf16.xpose.msra.mxu0 %v2687
        %3072 = vmatpush.bf16.xpose.msra.mxu0 %v2683
        %3073 = vmatpush.bf16.xpose.msra.mxu0 %v2679
        %3074 = vmatpush.bf16.xpose.msra.mxu0 %v2675
        %3075 = vmatpush.bf16.xpose.msra.mxu0 %v2671
        %3076 = vmatmul.bf16.gmra.mxu0 %v1899
        %v3077 = vpop.f32.mrf.mxu0
        %v3078 = vadd.f32 %v3064, %v3077
        %v3079 = vpop.f32.mrf.mxu0
        %v3080 = vadd.f32 %v3066, %v3079
        %3081 = vdwg.mxu0
        %3082 = vmatpush.bf16.xpose.msra.mxu0 %v2700
        %3083 = vmatpush.bf16.xpose.msra.mxu0 %v2696
        %3084 = vmatpush.bf16.xpose.msra.mxu0 %v2692
        %3085 = vmatpush.bf16.xpose.msra.mxu0 %v2688
        %3086 = vmatpush.bf16.xpose.msra.mxu0 %v2684
        %3087 = vmatpush.bf16.xpose.msra.mxu0 %v2680
        %3088 = vmatpush.bf16.xpose.msra.mxu0 %v2676
        %3089 = vmatpush.bf16.xpose.msra.mxu0 %v2672
        %3090 = vmatmul.bf16.gmra.mxu0 %v1900
        %v3091 = vpop.f32.mrf.mxu0
        %v3092 = vadd.f32 %v3078, %v3091
        %v3093 = vpop.f32.mrf.mxu0
        %v3094 = vadd.f32 %v3080, %v3093
        %3095 = vdwg.mxu0
        %3096 = vmatpush.bf16.xpose.msra.mxu0 %v2701
        %3097 = vmatpush.bf16.xpose.msra.mxu0 %v2697
        %3098 = vmatpush.bf16.xpose.msra.mxu0 %v2693
        %3099 = vmatpush.bf16.xpose.msra.mxu0 %v2689
        %3100 = vmatpush.bf16.xpose.msra.mxu0 %v2685
        %3101 = vmatpush.bf16.xpose.msra.mxu0 %v2681
        %3102 = vmatpush.bf16.xpose.msra.mxu0 %v2677
        %3103 = vmatpush.bf16.xpose.msra.mxu0 %v2673
        %3104 = vmatmul.bf16.gmra.mxu0 %v1901
        %v3105 = vpop.f32.mrf.mxu0
        %v3106 = vadd.f32 %v3092, %v3105
        %v3107 = vpop.f32.mrf.mxu0
        %v3108 = vadd.f32 %v3094, %v3107
        %3109 = vdwg.mxu0
        %3110 = vmatpush.bf16.xpose.msra.mxu0 %v2730
        %3111 = vmatpush.bf16.xpose.msra.mxu0 %v2726
        %3112 = vmatpush.bf16.xpose.msra.mxu0 %v2722
        %3113 = vmatpush.bf16.xpose.msra.mxu0 %v2718
        %3114 = vmatpush.bf16.xpose.msra.mxu0 %v2714
        %3115 = vmatpush.bf16.xpose.msra.mxu0 %v2710
        %3116 = vmatpush.bf16.xpose.msra.mxu0 %v2706
        %3117 = vmatpush.bf16.xpose.msra.mxu0 %v2702
        %3118 = vmatmul.bf16.gmra.mxu0 %v1898
        %v3119 = vpop.f32.mrf.mxu0
        %v3120 = vadd.f32 0.0, %v3119
        %v3121 = vpop.f32.mrf.mxu0
        %v3122 = vadd.f32 0.0, %v3121
        %3123 = vdwg.mxu0
        %3124 = vmatpush.bf16.xpose.msra.mxu0 %v2731
        %3125 = vmatpush.bf16.xpose.msra.mxu0 %v2727
        %3126 = vmatpush.bf16.xpose.msra.mxu0 %v2723
        %3127 = vmatpush.bf16.xpose.msra.mxu0 %v2719
        %3128 = vmatpush.bf16.xpose.msra.mxu0 %v2715
        %3129 = vmatpush.bf16.xpose.msra.mxu0 %v2711
        %3130 = vmatpush.bf16.xpose.msra.mxu0 %v2707
        %3131 = vmatpush.bf16.xpose.msra.mxu0 %v2703
        %3132 = vmatmul.bf16.gmra.mxu0 %v1899
        %v3133 = vpop.f32.mrf.mxu0
        %v3134 = vadd.f32 %v3120, %v3133
        %v3135 = vpop.f32.mrf.mxu0
        %v3136 = vadd.f32 %v3122, %v3135
        %3137 = vdwg.mxu0
        %3138 = vmatpush.bf16.xpose.msra.mxu0 %v2732
        %3139 = vmatpush.bf16.xpose.msra.mxu0 %v2728
        %3140 = vmatpush.bf16.xpose.msra.mxu0 %v2724
        %3141 = vmatpush.bf16.xpose.msra.mxu0 %v2720
        %3142 = vmatpush.bf16.xpose.msra.mxu0 %v2716
        %3143 = vmatpush.bf16.xpose.msra.mxu0 %v2712
        %3144 = vmatpush.bf16.xpose.msra.mxu0 %v2708
        %3145 = vmatpush.bf16.xpose.msra.mxu0 %v2704
        %3146 = vmatmul.bf16.gmra.mxu0 %v1900
        %v3147 = vpop.f32.mrf.mxu0
        %v3148 = vadd.f32 %v3134, %v3147
        %v3149 = vpop.f32.mrf.mxu0
        %v3150 = vadd.f32 %v3136, %v3149
        %3151 = vdwg.mxu0
        %3152 = vmatpush.bf16.xpose.msra.mxu0 %v2733
        %3153 = vmatpush.bf16.xpose.msra.mxu0 %v2729
        %3154 = vmatpush.bf16.xpose.msra.mxu0 %v2725
        %3155 = vmatpush.bf16.xpose.msra.mxu0 %v2721
        %3156 = vmatpush.bf16.xpose.msra.mxu0 %v2717
        %3157 = vmatpush.bf16.xpose.msra.mxu0 %v2713
        %3158 = vmatpush.bf16.xpose.msra.mxu0 %v2709
        %3159 = vmatpush.bf16.xpose.msra.mxu0 %v2705
        %3160 = vmatmul.bf16.gmra.mxu0 %v1901
        %v3161 = vpop.f32.mrf.mxu0
        %v3162 = vadd.f32 %v3148, %v3161
        %v3163 = vpop.f32.mrf.mxu0
        %v3164 = vadd.f32 %v3150, %v3163
        %3165 = vdwg.mxu0
        %3166 = vmatpush.bf16.xpose.msra.mxu0 %v2762
        %3167 = vmatpush.bf16.xpose.msra.mxu0 %v2758
        %3168 = vmatpush.bf16.xpose.msra.mxu0 %v2754
        %3169 = vmatpush.bf16.xpose.msra.mxu0 %v2750
        %3170 = vmatpush.bf16.xpose.msra.mxu0 %v2746
        %3171 = vmatpush.bf16.xpose.msra.mxu0 %v2742
        %3172 = vmatpush.bf16.xpose.msra.mxu0 %v2738
        %3173 = vmatpush.bf16.xpose.msra.mxu0 %v2734
        %3174 = vmatmul.bf16.gmra.mxu0 %v1898
        %v3175 = vpop.f32.mrf.mxu0
        %v3176 = vadd.f32 0.0, %v3175
        %v3177 = vpop.f32.mrf.mxu0
        %v3178 = vadd.f32 0.0, %v3177
        %3179 = vdwg.mxu0
        %3180 = vmatpush.bf16.xpose.msra.mxu0 %v2763
        %3181 = vmatpush.bf16.xpose.msra.mxu0 %v2759
        %3182 = vmatpush.bf16.xpose.msra.mxu0 %v2755
        %3183 = vmatpush.bf16.xpose.msra.mxu0 %v2751
        %3184 = vmatpush.bf16.xpose.msra.mxu0 %v2747
        %3185 = vmatpush.bf16.xpose.msra.mxu0 %v2743
        %3186 = vmatpush.bf16.xpose.msra.mxu0 %v2739
        %3187 = vmatpush.bf16.xpose.msra.mxu0 %v2735
        %3188 = vmatmul.bf16.gmra.mxu0 %v1899
        %v3189 = vpop.f32.mrf.mxu0
        %v3190 = vadd.f32 %v3176, %v3189
        %v3191 = vpop.f32.mrf.mxu0
        %v3192 = vadd.f32 %v3178, %v3191
        %3193 = vdwg.mxu0
        %3194 = vmatpush.bf16.xpose.msra.mxu0 %v2764
        %3195 = vmatpush.bf16.xpose.msra.mxu0 %v2760
        %3196 = vmatpush.bf16.xpose.msra.mxu0 %v2756
        %3197 = vmatpush.bf16.xpose.msra.mxu0 %v2752
        %3198 = vmatpush.bf16.xpose.msra.mxu0 %v2748
        %3199 = vmatpush.bf16.xpose.msra.mxu0 %v2744
        %3200 = vmatpush.bf16.xpose.msra.mxu0 %v2740
        %3201 = vmatpush.bf16.xpose.msra.mxu0 %v2736
        %3202 = vmatmul.bf16.gmra.mxu0 %v1900
        %v3203 = vpop.f32.mrf.mxu0
        %v3204 = vadd.f32 %v3190, %v3203
        %v3205 = vpop.f32.mrf.mxu0
        %v3206 = vadd.f32 %v3192, %v3205
        %3207 = vdwg.mxu0
        %3208 = vmatpush.bf16.xpose.msra.mxu0 %v2765
        %3209 = vmatpush.bf16.xpose.msra.mxu0 %v2761
        %3210 = vmatpush.bf16.xpose.msra.mxu0 %v2757
        %3211 = vmatpush.bf16.xpose.msra.mxu0 %v2753
        %3212 = vmatpush.bf16.xpose.msra.mxu0 %v2749
        %3213 = vmatpush.bf16.xpose.msra.mxu0 %v2745
        %3214 = vmatpush.bf16.xpose.msra.mxu0 %v2741
        %3215 = vmatpush.bf16.xpose.msra.mxu0 %v2737
        %3216 = vmatmul.bf16.gmra.mxu0 %v1901
        %v3217 = vpop.f32.mrf.mxu0
        %v3218 = vadd.f32 %v3204, %v3217
        %v3219 = vpop.f32.mrf.mxu0
        %v3220 = vadd.f32 %v3206, %v3219
        %3221 = vdwg.mxu0
        %3222 = vmatpush.bf16.xpose.msra.mxu0 %v2794
        %3223 = vmatpush.bf16.xpose.msra.mxu0 %v2790
        %3224 = vmatpush.bf16.xpose.msra.mxu0 %v2786
        %3225 = vmatpush.bf16.xpose.msra.mxu0 %v2782
        %3226 = vmatpush.bf16.xpose.msra.mxu0 %v2778
        %3227 = vmatpush.bf16.xpose.msra.mxu0 %v2774
        %3228 = vmatpush.bf16.xpose.msra.mxu0 %v2770
        %3229 = vmatpush.bf16.xpose.msra.mxu0 %v2766
        %3230 = vmatmul.bf16.gmra.mxu0 %v1898
        %v3231 = vpop.f32.mrf.mxu0
        %v3232 = vadd.f32 0.0, %v3231
        %v3233 = vpop.f32.mrf.mxu0
        %v3234 = vadd.f32 0.0, %v3233
        %3235 = vdwg.mxu0
        %3236 = vmatpush.bf16.xpose.msra.mxu0 %v2795
        %3237 = vmatpush.bf16.xpose.msra.mxu0 %v2791
        %3238 = vmatpush.bf16.xpose.msra.mxu0 %v2787
        %3239 = vmatpush.bf16.xpose.msra.mxu0 %v2783
        %3240 = vmatpush.bf16.xpose.msra.mxu0 %v2779
        %3241 = vmatpush.bf16.xpose.msra.mxu0 %v2775
        %3242 = vmatpush.bf16.xpose.msra.mxu0 %v2771
        %3243 = vmatpush.bf16.xpose.msra.mxu0 %v2767
        %3244 = vmatmul.bf16.gmra.mxu0 %v1899
        %v3245 = vpop.f32.mrf.mxu0
        %v3246 = vadd.f32 %v3232, %v3245
        %v3247 = vpop.f32.mrf.mxu0
        %v3248 = vadd.f32 %v3234, %v3247
        %3249 = vdwg.mxu0
        %3250 = vmatpush.bf16.xpose.msra.mxu0 %v2796
        %3251 = vmatpush.bf16.xpose.msra.mxu0 %v2792
        %3252 = vmatpush.bf16.xpose.msra.mxu0 %v2788
        %3253 = vmatpush.bf16.xpose.msra.mxu0 %v2784
        %3254 = vmatpush.bf16.xpose.msra.mxu0 %v2780
        %3255 = vmatpush.bf16.xpose.msra.mxu0 %v2776
        %3256 = vmatpush.bf16.xpose.msra.mxu0 %v2772
        %3257 = vmatpush.bf16.xpose.msra.mxu0 %v2768
        %3258 = vmatmul.bf16.gmra.mxu0 %v1900
        %v3259 = vpop.f32.mrf.mxu0
        %v3260 = vadd.f32 %v3246, %v3259
        %v3261 = vpop.f32.mrf.mxu0
        %v3262 = vadd.f32 %v3248, %v3261
        %3263 = vdwg.mxu0
        %3264 = vmatpush.bf16.xpose.msra.mxu0 %v2797
        %3265 = vmatpush.bf16.xpose.msra.mxu0 %v2793
        %3266 = vmatpush.bf16.xpose.msra.mxu0 %v2789
        %3267 = vmatpush.bf16.xpose.msra.mxu0 %v2785
        %3268 = vmatpush.bf16.xpose.msra.mxu0 %v2781
        %3269 = vmatpush.bf16.xpose.msra.mxu0 %v2777
        %3270 = vmatpush.bf16.xpose.msra.mxu0 %v2773
        %3271 = vmatpush.bf16.xpose.msra.mxu0 %v2769
        %3272 = vmatmul.bf16.gmra.mxu0 %v1901
        %v3273 = vpop.f32.mrf.mxu0
        %v3274 = vadd.f32 %v3260, %v3273
        %v3275 = vpop.f32.mrf.mxu0
        %v3276 = vadd.f32 %v3262, %v3275
        %3277 = vdwg.mxu0
        %3278 = vmatpush.bf16.xpose.msra.mxu0 %v2826
        %3279 = vmatpush.bf16.xpose.msra.mxu0 %v2822
        %3280 = vmatpush.bf16.xpose.msra.mxu0 %v2818
        %3281 = vmatpush.bf16.xpose.msra.mxu0 %v2814
        %3282 = vmatpush.bf16.xpose.msra.mxu0 %v2810
        %3283 = vmatpush.bf16.xpose.msra.mxu0 %v2806
        %3284 = vmatpush.bf16.xpose.msra.mxu0 %v2802
        %3285 = vmatpush.bf16.xpose.msra.mxu0 %v2798
        %3286 = vmatmul.bf16.gmra.mxu0 %v1898
        %v3287 = vpop.f32.mrf.mxu0
        %v3288 = vadd.f32 0.0, %v3287
        %v3289 = vpop.f32.mrf.mxu0
        %v3290 = vadd.f32 0.0, %v3289
        %3291 = vdwg.mxu0
        %3292 = vmatpush.bf16.xpose.msra.mxu0 %v2827
        %3293 = vmatpush.bf16.xpose.msra.mxu0 %v2823
        %3294 = vmatpush.bf16.xpose.msra.mxu0 %v2819
        %3295 = vmatpush.bf16.xpose.msra.mxu0 %v2815
        %3296 = vmatpush.bf16.xpose.msra.mxu0 %v2811
        %3297 = vmatpush.bf16.xpose.msra.mxu0 %v2807
        %3298 = vmatpush.bf16.xpose.msra.mxu0 %v2803
        %3299 = vmatpush.bf16.xpose.msra.mxu0 %v2799
        %3300 = vmatmul.bf16.gmra.mxu0 %v1899
        %v3301 = vpop.f32.mrf.mxu0
        %v3302 = vadd.f32 %v3288, %v3301
        %v3303 = vpop.f32.mrf.mxu0
        %v3304 = vadd.f32 %v3290, %v3303
        %3305 = vdwg.mxu0
        %3306 = vmatpush.bf16.xpose.msra.mxu0 %v2828
        %3307 = vmatpush.bf16.xpose.msra.mxu0 %v2824
        %3308 = vmatpush.bf16.xpose.msra.mxu0 %v2820
        %3309 = vmatpush.bf16.xpose.msra.mxu0 %v2816
        %3310 = vmatpush.bf16.xpose.msra.mxu0 %v2812
        %3311 = vmatpush.bf16.xpose.msra.mxu0 %v2808
        %3312 = vmatpush.bf16.xpose.msra.mxu0 %v2804
        %3313 = vmatpush.bf16.xpose.msra.mxu0 %v2800
        %3314 = vmatmul.bf16.gmra.mxu0 %v1900
        %v3315 = vpop.f32.mrf.mxu0
        %v3316 = vadd.f32 %v3302, %v3315
        %v3317 = vpop.f32.mrf.mxu0
        %v3318 = vadd.f32 %v3304, %v3317
        %3319 = vdwg.mxu0
        %3320 = vmatpush.bf16.xpose.msra.mxu0 %v2829
        %3321 = vmatpush.bf16.xpose.msra.mxu0 %v2825
        %3322 = vmatpush.bf16.xpose.msra.mxu0 %v2821
        %3323 = vmatpush.bf16.xpose.msra.mxu0 %v2817
        %3324 = vmatpush.bf16.xpose.msra.mxu0 %v2813
        %3325 = vmatpush.bf16.xpose.msra.mxu0 %v2809
        %3326 = vmatpush.bf16.xpose.msra.mxu0 %v2805
        %3327 = vmatpush.bf16.xpose.msra.mxu0 %v2801
        %3328 = vmatmul.bf16.gmra.mxu0 %v1901
        %v3329 = vpop.f32.mrf.mxu0
        %v3330 = vadd.f32 %v3316, %v3329
        %v3331 = vpop.f32.mrf.mxu0
        %v3332 = vadd.f32 %v3318, %v3331
        %3333 = vdwg.mxu0
        %3334 = vmatpush.bf16.xpose.msra.mxu0 %v2858
        %3335 = vmatpush.bf16.xpose.msra.mxu0 %v2854
        %3336 = vmatpush.bf16.xpose.msra.mxu0 %v2850
        %3337 = vmatpush.bf16.xpose.msra.mxu0 %v2846
        %3338 = vmatpush.bf16.xpose.msra.mxu0 %v2842
        %3339 = vmatpush.bf16.xpose.msra.mxu0 %v2838
        %3340 = vmatpush.bf16.xpose.msra.mxu0 %v2834
        %3341 = vmatpush.bf16.xpose.msra.mxu0 %v2830
        %3342 = vmatmul.bf16.gmra.mxu0 %v1898
        %v3343 = vpop.f32.mrf.mxu0
        %v3344 = vadd.f32 0.0, %v3343
        %v3345 = vpop.f32.mrf.mxu0
        %v3346 = vadd.f32 0.0, %v3345
        %3347 = vdwg.mxu0
        %3348 = vmatpush.bf16.xpose.msra.mxu0 %v2859
        %3349 = vmatpush.bf16.xpose.msra.mxu0 %v2855
        %3350 = vmatpush.bf16.xpose.msra.mxu0 %v2851
        %3351 = vmatpush.bf16.xpose.msra.mxu0 %v2847
        %3352 = vmatpush.bf16.xpose.msra.mxu0 %v2843
        %3353 = vmatpush.bf16.xpose.msra.mxu0 %v2839
        %3354 = vmatpush.bf16.xpose.msra.mxu0 %v2835
        %3355 = vmatpush.bf16.xpose.msra.mxu0 %v2831
        %3356 = vmatmul.bf16.gmra.mxu0 %v1899
        %v3357 = vpop.f32.mrf.mxu0
        %v3358 = vadd.f32 %v3344, %v3357
        %v3359 = vpop.f32.mrf.mxu0
        %v3360 = vadd.f32 %v3346, %v3359
        %3361 = vdwg.mxu0
        %3362 = vmatpush.bf16.xpose.msra.mxu0 %v2860
        %3363 = vmatpush.bf16.xpose.msra.mxu0 %v2856
        %3364 = vmatpush.bf16.xpose.msra.mxu0 %v2852
        %3365 = vmatpush.bf16.xpose.msra.mxu0 %v2848
        %3366 = vmatpush.bf16.xpose.msra.mxu0 %v2844
        %3367 = vmatpush.bf16.xpose.msra.mxu0 %v2840
        %3368 = vmatpush.bf16.xpose.msra.mxu0 %v2836
        %3369 = vmatpush.bf16.xpose.msra.mxu0 %v2832
        %3370 = vmatmul.bf16.gmra.mxu0 %v1900
        %v3371 = vpop.f32.mrf.mxu0
        %v3372 = vadd.f32 %v3358, %v3371
        %v3373 = vpop.f32.mrf.mxu0
        %v3374 = vadd.f32 %v3360, %v3373
        %3375 = vdwg.mxu0
        %3376 = vmatpush.bf16.xpose.msra.mxu0 %v2861
        %3377 = vmatpush.bf16.xpose.msra.mxu0 %v2857
        %3378 = vmatpush.bf16.xpose.msra.mxu0 %v2853
        %3379 = vmatpush.bf16.xpose.msra.mxu0 %v2849
        %3380 = vmatpush.bf16.xpose.msra.mxu0 %v2845
        %3381 = vmatpush.bf16.xpose.msra.mxu0 %v2841
        %3382 = vmatpush.bf16.xpose.msra.mxu0 %v2837
        %3383 = vmatpush.bf16.xpose.msra.mxu0 %v2833
        %3384 = vmatmul.bf16.gmra.mxu0 %v1901
        %v3385 = vpop.f32.mrf.mxu0
        %v3386 = vadd.f32 %v3372, %v3385
        %v3387 = vpop.f32.mrf.mxu0
        %v3388 = vadd.f32 %v3374, %v3387
        %3389 = vdwg.mxu0
        %p3390 = scmp.eq.s32.totalorder %s29, 0
        // Predicated region
        $region61: #{tpu_custom_call.1} parent=39 // pred_check
          %p3391 = pneg %p3390
        $region62: #{tpu_custom_call.1} parent=39 // pred_check_branch
          %3393 = sbr.rel (%p3391) target = $region64
        $region63: #{tpu_custom_call.1} parent=39 // pred_region
          %3394 = vst [vmem:[#allocation11] sm:$0xff] %v3106
          %3395 = vst [vmem:[#allocation11 + $0x8] sm:$0xff] %v3162
          %3396 = vst [vmem:[#allocation11 + $0x10] sm:$0xff] %v3218
          %3397 = vst [vmem:[#allocation11 + $0x18] sm:$0xff] %v3274
          %3398 = vst [vmem:[#allocation11 + $0x20] sm:$0xff] %v3330
          %3399 = vst [vmem:[#allocation11 + $0x28] sm:$0xff] %v3386
          %3400 = vst [vmem:[#allocation11 + $0x30] sm:$0xff] %v3108
          %3401 = vst [vmem:[#allocation11 + $0x38] sm:$0xff] %v3164
          %3402 = vst [vmem:[#allocation11 + $0x40] sm:$0xff] %v3220
          %3403 = vst [vmem:[#allocation11 + $0x48] sm:$0xff] %v3276
          %3404 = vst [vmem:[#allocation11 + $0x50] sm:$0xff] %v3332
          %3405 = vst [vmem:[#allocation11 + $0x58] sm:$0xff] %v3388
        $region64: #{tpu_custom_call.1} parent=39 // pred_fallthru
          _
        %p3406 = scmp.gt.s32.totalorder %s29, 0
        // Predicated region
        $region65: #{tpu_custom_call.1} parent=39 // pred_check
          %p3407 = pneg %p3406
        $region66: #{tpu_custom_call.1} parent=39 // pred_check_branch
          %3409 = sbr.rel (%p3407) target = $region68
        $region67: #{tpu_custom_call.1} parent=39 // pred_region
          %v3410 = vld [vmem:[#allocation11] sm:$0xff]
          %v3411 = vld [vmem:[#allocation11 + $0x8] sm:$0xff]
          %v3412 = vld [vmem:[#allocation11 + $0x10] sm:$0xff]
          %v3413 = vld [vmem:[#allocation11 + $0x18] sm:$0xff]
          %v3414 = vld [vmem:[#allocation11 + $0x20] sm:$0xff]
          %v3415 = vld [vmem:[#allocation11 + $0x28] sm:$0xff]
          %v3416 = vld [vmem:[#allocation11 + $0x30] sm:$0xff]
          %v3417 = vld [vmem:[#allocation11 + $0x38] sm:$0xff]
          %v3418 = vld [vmem:[#allocation11 + $0x40] sm:$0xff]
          %v3419 = vld [vmem:[#allocation11 + $0x48] sm:$0xff]
          %v3420 = vld [vmem:[#allocation11 + $0x50] sm:$0xff]
          %v3421 = vld [vmem:[#allocation11 + $0x58] sm:$0xff]
          %v3422 = vadd.f32 %v3410, %v3106
          %v3423 = vadd.f32 %v3411, %v3162
          %v3424 = vadd.f32 %v3412, %v3218
          %v3425 = vadd.f32 %v3413, %v3274
          %v3426 = vadd.f32 %v3414, %v3330
          %v3427 = vadd.f32 %v3415, %v3386
          %v3428 = vadd.f32 %v3416, %v3108
          %v3429 = vadd.f32 %v3417, %v3164
          %v3430 = vadd.f32 %v3418, %v3220
          %v3431 = vadd.f32 %v3419, %v3276
          %v3432 = vadd.f32 %v3420, %v3332
          %v3433 = vadd.f32 %v3421, %v3388
          %3434 = vst [vmem:[#allocation11] sm:$0xff] %v3422
          %3435 = vst [vmem:[#allocation11 + $0x8] sm:$0xff] %v3423
          %3436 = vst [vmem:[#allocation11 + $0x10] sm:$0xff] %v3424
          %3437 = vst [vmem:[#allocation11 + $0x18] sm:$0xff] %v3425
          %3438 = vst [vmem:[#allocation11 + $0x20] sm:$0xff] %v3426
          %3439 = vst [vmem:[#allocation11 + $0x28] sm:$0xff] %v3427
          %3440 = vst [vmem:[#allocation11 + $0x30] sm:$0xff] %v3428
          %3441 = vst [vmem:[#allocation11 + $0x38] sm:$0xff] %v3429
          %3442 = vst [vmem:[#allocation11 + $0x40] sm:$0xff] %v3430
          %3443 = vst [vmem:[#allocation11 + $0x48] sm:$0xff] %v3431
          %3444 = vst [vmem:[#allocation11 + $0x50] sm:$0xff] %v3432
          %3445 = vst [vmem:[#allocation11 + $0x58] sm:$0xff] %v3433
        $region68: #{tpu_custom_call.1} parent=39 // pred_fallthru
          _
        %p3446 = scmp.eq.s32.totalorder %s29, 1
        // Predicated region
        $region69: #{tpu_custom_call.1} parent=39 // pred_check
          %p3447 = pneg %p3446
        $region70: #{tpu_custom_call.1} parent=39 // pred_check_branch
          %3449 = sbr.rel (%p3447) target = $region72
        $region71: #{tpu_custom_call.1} parent=39 // pred_region
          %v3450 = vld [vmem:[#allocation11] sm:$0xff]
          %v3451 = vld [vmem:[#allocation11 + $0x8] sm:$0xff]
          %v3452 = vld [vmem:[#allocation11 + $0x10] sm:$0xff]
          %v3453 = vld [vmem:[#allocation11 + $0x18] sm:$0xff]
          %v3454 = vld [vmem:[#allocation11 + $0x20] sm:$0xff]
          %v3455 = vld [vmem:[#allocation11 + $0x28] sm:$0xff]
          %v3456 = vld [vmem:[#allocation11 + $0x30] sm:$0xff]
          %v3457 = vld [vmem:[#allocation11 + $0x38] sm:$0xff]
          %v3458 = vld [vmem:[#allocation11 + $0x40] sm:$0xff]
          %v3459 = vld [vmem:[#allocation11 + $0x48] sm:$0xff]
          %v3460 = vld [vmem:[#allocation11 + $0x50] sm:$0xff]
          %v3461 = vld [vmem:[#allocation11 + $0x58] sm:$0xff]
          %v3462 = vld [vmem:[#allocation10] sm:$0x3f]
          %v3464 = vperm.slane %v3462, 0
          %v3465 = vperm.slane %v3462, 1
          %v3466 = vperm.slane %v3462, 2
          %v3467 = vperm.slane %v3462, 3
          %v3468 = vperm.slane %v3462, 4
          %v3469 = vperm.slane %v3462, 5
          %v3476 = vadd.f32 %v3450, %v3464
          %v3477 = vadd.f32 %v3451, %v3465
          %v3478 = vadd.f32 %v3452, %v3466
          %v3479 = vadd.f32 %v3453, %v3467
          %v3480 = vadd.f32 %v3454, %v3468
          %v3481 = vadd.f32 %v3455, %v3469
          %v3482 = vadd.f32 %v3456, %v3464
          %v3483 = vadd.f32 %v3457, %v3465
          %v3484 = vadd.f32 %v3458, %v3466
          %v3485 = vadd.f32 %v3459, %v3467
          %v3486 = vadd.f32 %v3460, %v3468
          %v3487 = vadd.f32 %v3461, %v3469
          %3488 = vst [vmem:[#allocation11] sm:$0xff] %v3476
          %3489 = vst [vmem:[#allocation11 + $0x8] sm:$0xff] %v3477
          %3490 = vst [vmem:[#allocation11 + $0x10] sm:$0xff] %v3478
          %3491 = vst [vmem:[#allocation11 + $0x18] sm:$0xff] %v3479
          %3492 = vst [vmem:[#allocation11 + $0x20] sm:$0xff] %v3480
          %3493 = vst [vmem:[#allocation11 + $0x28] sm:$0xff] %v3481
          %3494 = vst [vmem:[#allocation11 + $0x30] sm:$0xff] %v3482
          %3495 = vst [vmem:[#allocation11 + $0x38] sm:$0xff] %v3483
          %3496 = vst [vmem:[#allocation11 + $0x40] sm:$0xff] %v3484
          %3497 = vst [vmem:[#allocation11 + $0x48] sm:$0xff] %v3485
          %3498 = vst [vmem:[#allocation11 + $0x50] sm:$0xff] %v3486
          %3499 = vst [vmem:[#allocation11 + $0x58] sm:$0xff] %v3487
        $region72: #{tpu_custom_call.1} parent=39 // pred_fallthru
          _
        // Predicated region
        $region73: #{tpu_custom_call.1} parent=39 // pred_check
          %p3500 = pneg %p179
        $region74: #{tpu_custom_call.1} parent=39 // pred_check_branch
          %3502 = sbr.rel (%p3500) target = $region76
        $region75: #{tpu_custom_call.1} parent=39 // pred_region
          %s3503 = smul.u32 2, %s28
          %3505 = vsyncadd [#allocation4], 0
          %s3506 = smul.addr %s3503, 6
          %s3507 = smul.addr %s3506, 8
          %s3508 = scalar_lea.hbm %s5, %s3507
          %s3509 = sshll.u32 [#allocation11], 4
          %s3510 = int_to_ptr.vmem [resolvable:$true] %s3509
          %s3511 = sshll.u32 %s3508, 4
          %s3512 = int_to_ptr.hbm [resolvable:$true] %s3511
          %3517 = dma.vmem_to_hbm [thread:$0]  %s3510, 1536, %s3512, [#allocation4], 768, 768, 48
        $region76: #{tpu_custom_call.1} parent=39 // pred_fallthru
          _
        // Predicated region
        $region77: #{tpu_custom_call.1} parent=39 // pred_check
          %p3518 = pneg %p179
        $region78: #{tpu_custom_call.1} parent=39 // pred_check_branch
          %3520 = sbr.rel (%p3518) target = $region80
        $region79: #{tpu_custom_call.1} parent=39 // pred_region
          %3522 = dma.done [#allocation4], 1536
        $region80: #{tpu_custom_call.1} parent=39 // pred_fallthru
          _
      $region40: #{tpu_custom_call.1} parent=5 // pred_fallthru
        _
      %p3523 = scmp.le.s32.totalorder 2, %s19
      // Predicated region
      $region81: #{tpu_custom_call.1} parent=5 // pred_check
        %p3524 = pneg %p3523
      $region82: #{tpu_custom_call.1} parent=5 // pred_check_branch
        %3526 = sbr.rel (%p3524) target = $region84
      $region83: #{tpu_custom_call.1} parent=5 // pred_region
        %s3527 = ssub.s32 %s19, 2
      $region84: #{tpu_custom_call.1} parent=5 // pred_fallthru
        _
    $region6: #{tpu_custom_call.1} parent=1 // loop_footer
      %s23 = sadd.s32 1, %s19
    $region7: #{tpu_custom_call.1} parent=1 // loop_footer_branch
      %18 = sbr.rel target = $region3
    $region8: #{tpu_custom_call.1} parent=1 // loop_exit
      _
    %3528 = vsyncpa [#allocation3], 1
    %s3529 = scalar_lea.sflag [#allocation3], 1
    %3530 = vsyncpa %s3529, 1
    %3531 = vsyncpa [#allocation6], 1
    %s3532 = scalar_lea.sflag [#allocation6], 1
    %3533 = vsyncpa %s3532, 1
    %3534 = vsyncpa [#allocation9], 1
    %s3535 = scalar_lea.sflag [#allocation9], 1
    %3536 = vsyncpa %s3535, 1
    %3537 = vsyncpa [#allocation4], 1
    %s3538 = scalar_lea.sflag [#allocation4], 1
    %3539 = vsyncpa %s3538, 1

</llo_original>
